<compile_context>
chip_gen: v7x
topology: tpu7x:2x2x1
jax: 0.10.0
libtpu: 0.0.40
codegen_flags: <defaults>
</compile_context>

<pallas_src>
import jax
import jax.numpy as jnp
from jax.experimental import pallas as pl
from jax.experimental.pallas import tpu as pltpu

NEG_SLOPE = 0.01     # default nn.LeakyReLU negative_slope
MLP_SCALE = 0.01     # NeuralAdjointMap.mlp_scale


def _round_up(x, m):
    return ((x + m - 1) // m) * m


def _auto_tile_m(n):
    """Batch tile: multiple of 256 (MXU M fill / bf16 packing), aiming for >=8 grid steps
    (>=4 per TC on v7x), capped at 2048 rows.  Tiny batches use multiples of 16."""
    if n > 256:
        return min(2048, _round_up(pl.cdiv(n, 8), 256))
    return max(16, _round_up(pl.cdiv(n, 2), 16))


def _make_nam_kernel(num_hidden, out_pad, output_dim):
    """Fused kernel: [fmap | layer1] = x @ W01 ; hidden layers ; out = fmap + h @ W_last' + b_last'."""

    def kernel(x_ref, w01_ref, b1_ref, *rest):
        o_ref = rest[-1]
        wb = rest[:-1]            # (w_hidden, b_hidden)* , w_last', b_last'

        xb = x_ref[...].astype(jnp.bfloat16)

        # Fused GEMM: linear branch + MLP layer 1 share the same LHS (K = input_dim).
        z01 = jnp.dot(xb, w01_ref[...], preferred_element_type=jnp.float32)
        fmap = z01[:, :out_pad]                       # linear branch (lane-padded, zeros beyond output_dim)
        z = z01[:, out_pad:] + b1_ref[...]            # MLP layer-1 pre-activation (f32 bias)
        h = jnp.where(z >= 0, z, NEG_SLOPE * z).astype(jnp.bfloat16)

        # Hidden MLP layers: bf16 MXU operands, f32 bias/activation (v5e-safe).
        for l in range(num_hidden):
            z = (jnp.dot(h, wb[2 * l][...], preferred_element_type=jnp.float32)
                 + wb[2 * l + 1][...])
            h = jnp.where(z >= 0, z, NEG_SLOPE * z).astype(jnp.bfloat16)

        # Last MLP layer: mlp_scale pre-folded into (w_last, b_last); accumulate with fmap in f32.
        out = (fmap
               + jnp.dot(h, wb[-2][...], preferred_element_type=jnp.float32)
               + wb[-1][...])

        # Store only the real output_dim lanes -> exact-size HBM write, no wrapper re-slice.
        o_ref[...] = out[:, :output_dim].astype(o_ref.dtype)

    return kernel


def nam_forward(x, linear_w, mlp_params, *, tile_m=None, mlp_scale=MLP_SCALE):
    """NeuralAdjointMap forward via one fused Pallas kernel tiled over the batch.

    linear_w   : (input_dim, output_dim)  -- transposed vs. PyTorch's nn.Linear.weight
    mlp_params : list of (w, b) with w (in, out) and b (1, out) / (out,); needs >= 2 layers.
    """
    input_dim, output_dim = linear_w.shape
    x = x[:, :input_dim]                          # matches `x[:, :self.input_dim]`
    n = x.shape[0]
    num_layers = len(mlp_params)
    if num_layers < 2:
        raise ValueError("fused kernel expects an MLP with depth >= 1 (>= 2 linear layers)")
    width = mlp_params[0][0].shape[1]
    num_hidden = num_layers - 2

    # ---- batch tiling: no jnp.pad; ragged last block handled by the bounds-checked DMA ----
    if tile_m is None:
        tile_m = _auto_tile_m(n)
    else:
        tile_m = max(16, _round_up(tile_m, 16))
    grid_m = pl.cdiv(n, tile_m)

    # ---- parameter preprocessing ----
    out_pad = _round_up(output_dim, 128)          # 128-aligned split point for the fused GEMM
    pad_cols = out_pad - output_dim

    w1, b1 = mlp_params[0]
    w01 = jnp.concatenate(
        [jnp.pad(linear_w, ((0, 0), (0, pad_cols))), w1], axis=1).astype(jnp.bfloat16)
    b1 = b1.astype(jnp.float32).reshape(1, -1)

    flat = []
    for (w, b) in mlp_params[1:-1]:
        flat.append(w.astype(jnp.bfloat16))
        flat.append(b.astype(jnp.float32).reshape(1, -1))
    w_last, b_last = mlp_params[-1]               # fold mlp_scale + lane-pad for full-vreg adds
    flat.append(jnp.pad(w_last * mlp_scale, ((0, 0), (0, pad_cols))).astype(jnp.bfloat16))
    flat.append(jnp.pad((b_last * mlp_scale).astype(jnp.float32).reshape(1, -1),
                        ((0, 0), (0, pad_cols))))

    # ---- block specs (weights resident via constant index_maps) ----
    def const_spec(arr):
        return pl.BlockSpec(arr.shape, lambda i: (0, 0))

    in_specs = [pl.BlockSpec((tile_m, input_dim), lambda i: (i, 0)),
                const_spec(w01), const_spec(b1)]
    in_specs += [const_spec(a) for a in flat]
    out_spec = pl.BlockSpec((tile_m, output_dim), lambda i: (i, 0))

    # ---- advisory cost estimate ----
    flops = 2 * n * (input_dim * (out_pad + width)
                     + num_hidden * width * width
                     + width * out_pad)
    bytes_accessed = int(x.size) * x.dtype.itemsize
    bytes_accessed += sum(int(a.size) * a.dtype.itemsize for a in [w01, b1] + flat)
    bytes_accessed += n * output_dim * x.dtype.itemsize

    out = pl.pallas_call(
        _make_nam_kernel(num_hidden, out_pad, output_dim),
        out_shape=jax.ShapeDtypeStruct((n, output_dim), x.dtype),
        grid_spec=pltpu.PrefetchScalarGridSpec(
            num_scalar_prefetch=0,
            grid=(grid_m,),
            in_specs=in_specs,
            out_specs=out_spec,
        ),
        compiler_params=pltpu.CompilerParams(
            dimension_semantics=("parallel",)),
        cost_estimate=pl.CostEstimate(flops=int(flops), transcendentals=0,
                                      bytes_accessed=int(bytes_accessed)),
    )(x, w01, b1, *flat)

    return jnp.squeeze(out)                       # matches `.squeeze()`


def init_nam_params(key, input_dim, output_dim, depth=2, width=128, dtype=jnp.float32):
    """Xavier-uniform weights (as in _reset_parameters); default nn.Linear-style biases.

    Weights are stored as (in_features, out_features) so the kernel computes x @ W,
    which equals PyTorch's x @ W_pt.T.
    """
    k_lin, key = jax.random.split(key)
    bound = (6.0 / (input_dim + output_dim)) ** 0.5
    linear_w = jax.random.uniform(k_lin, (input_dim, output_dim), dtype,
                                  minval=-bound, maxval=bound)

    mlp_params = []
    dims = [input_dim] + [width] * depth + [output_dim]
    for fan_in, fan_out in zip(dims[:-1], dims[1:]):
        key, kw, kb = jax.random.split(key, 3)
        wb = (6.0 / (fan_in + fan_out)) ** 0.5
        w = jax.random.uniform(kw, (fan_in, fan_out), dtype, minval=-wb, maxval=wb)
        bbound = 1.0 / (fan_in ** 0.5)
        b = jax.random.uniform(kb, (1, fan_out), dtype, minval=-bbound, maxval=bbound)
        mlp_params.append((w, b))
    return linear_w, mlp_params


def nam_recipe_reference(x, linear_w, mlp_params, mlp_scale=MLP_SCALE):
    """Pure-JAX reference mimicking the kernel recipe (bf16 MXU operands, f32 accumulation,
    mlp_scale folded into the last layer)."""
    input_dim = linear_w.shape[0]
    x = x[:, :input_dim]
    xb = x.astype(jnp.bfloat16)
    fmap = jnp.dot(xb, linear_w.astype(jnp.bfloat16), preferred_element_type=jnp.float32)
    h = xb
    t = None
    for l, (w, b) in enumerate(mlp_params):
        if l == len(mlp_params) - 1:
            w_s = (w * mlp_scale).astype(jnp.bfloat16)
            b_s = (b * mlp_scale).astype(jnp.float32).reshape(1, -1)
            t = jnp.dot(h, w_s, preferred_element_type=jnp.float32) + b_s
        else:
            z = jnp.dot(h, w.astype(jnp.bfloat16), preferred_element_type=jnp.float32)
            z = z + b.astype(jnp.float32).reshape(1, -1)
            z = jnp.where(z >= 0, z, NEG_SLOPE * z)
            h = z.astype(jnp.bfloat16)
    return jnp.squeeze((fmap + t).astype(x.dtype))


def nam_f32_reference(x, linear_w, mlp_params, mlp_scale=MLP_SCALE):
    """Pure-f32 reference (exact PyTorch-equivalent math)."""
    input_dim = linear_w.shape[0]
    x = x[:, :input_dim]
    fmap = x @ linear_w
    h = x
    t = None
    for l, (w, b) in enumerate(mlp_params):
        z = h @ w + b.reshape(1, -1)
        if l < len(mlp_params) - 1:
            h = jnp.where(z >= 0, z, NEG_SLOPE * z)
        else:
            t = z
    return jnp.squeeze(fmap + mlp_scale * t)


if __name__ == "__main__":
    key = jax.random.PRNGKey(0)
    k_x, k_x2, k_p = jax.random.split(key, 3)

    batch = 512
    input_dim = 32
    output_dim = 32      # NAM default: output_dim = input_dim

    x = jax.random.normal(k_x, (batch, input_dim), jnp.float32)
    linear_w, mlp_params = init_nam_params(k_p, input_dim, output_dim, depth=2, width=128)

    run = jax.jit(nam_forward)
    out = jax.block_until_ready(run(x, linear_w, mlp_params))
    assert out.shape == (batch, output_dim), out.shape

    # Recipe-matched reference (same bf16-operand / f32-accum math as the kernel).
    ref_recipe = nam_recipe_reference(x, linear_w, mlp_params)
    assert jnp.allclose(out, ref_recipe, atol=1e-2, rtol=1e-2), \
        float(jnp.max(jnp.abs(out - ref_recipe)))

    # Pure-f32 (PyTorch-equivalent) reference.  Tolerance justified by the bf16 MXU operands:
    # per-element error ~ O(sqrt(K) * 2^-8 * |term|) with K=32 and O(1) activations.
    ref_f32 = nam_f32_reference(x, linear_w, mlp_params)
    assert jnp.allclose(out, ref_f32, atol=5e-2, rtol=5e-2), \
        float(jnp.max(jnp.abs(out - ref_f32)))

    # Ragged batch (n % tile_m != 0): exercises the un-padded cdiv grid / dropped last-block rows.
    batch2 = 200
    x2 = jax.random.normal(k_x2, (batch2, input_dim), jnp.float32)
    out2 = jax.block_until_ready(run(x2, linear_w, mlp_params))
    ref2 = nam_recipe_reference(x2, linear_w, mlp_params)
    assert out2.shape == (batch2, output_dim), out2.shape
    assert jnp.allclose(out2, ref2, atol=1e-2, rtol=1e-2), \
        float(jnp.max(jnp.abs(out2 - ref2)))

    print("KERNEL_OK")
</pallas_src>

<mosaic_0001>
module attributes {stable_mosaic.version = 11 : i64} {
  func.func @kernel(%arg0: i32, %arg1: memref<256x32xf32, #tpu.memory_space<vmem>>, %arg2: memref<32x256xbf16, #tpu.memory_space<vmem>>, %arg3: memref<1x128xf32, #tpu.memory_space<vmem>>, %arg4: memref<128x128xbf16, #tpu.memory_space<vmem>>, %arg5: memref<1x128xf32, #tpu.memory_space<vmem>>, %arg6: memref<128x128xbf16, #tpu.memory_space<vmem>>, %arg7: memref<1x128xf32, #tpu.memory_space<vmem>>, %arg8: memref<256x32xf32, #tpu.memory_space<vmem>>) attributes {dimension_semantics = [#tpu.dimension_semantics<parallel>], iteration_bounds = array<i64: 2>, scalar_prefetch = 0 : i64, scratch_operands = 0 : i64, tpu.core_type = #tpu.core_type<tc>, window_params = [{transform_indices = @transform_0, window_bounds = array<i64: 256, 32>}, {pipeline_mode = #tpu.pipeline_mode<synchronous>, transform_indices = @transform_1, window_bounds = array<i64: 32, 256>}, {pipeline_mode = #tpu.pipeline_mode<synchronous>, transform_indices = @transform_2, window_bounds = array<i64: 1, 128>}, {pipeline_mode = #tpu.pipeline_mode<synchronous>, transform_indices = @transform_3, window_bounds = array<i64: 128, 128>}, {pipeline_mode = #tpu.pipeline_mode<synchronous>, transform_indices = @transform_4, window_bounds = array<i64: 1, 128>}, {pipeline_mode = #tpu.pipeline_mode<synchronous>, transform_indices = @transform_5, window_bounds = array<i64: 128, 128>}, {pipeline_mode = #tpu.pipeline_mode<synchronous>, transform_indices = @transform_6, window_bounds = array<i64: 1, 128>}, {transform_indices = @transform_7, window_bounds = array<i64: 256, 32>}]} {
    %c0 = arith.constant 0 : index
    %c0_0 = arith.constant 0 : index
    %0 = vector.load %arg1[%c0, %c0_0] : memref<256x32xf32, #tpu.memory_space<vmem>>, vector<256x32xf32>
    %1 = arith.truncf %0 : vector<256x32xf32> to vector<256x32xbf16>
    %c0_1 = arith.constant 0 : index
    %c0_2 = arith.constant 0 : index
    %2 = vector.load %arg2[%c0_1, %c0_2] : memref<32x256xbf16, #tpu.memory_space<vmem>>, vector<32x256xbf16>
    %cst = arith.constant dense<0.000000e+00> : vector<256x256xf32>
    %3 = tpu.matmul %1, %2, %cst {dimension_numbers = #tpu.dot_dimension_numbers<[1], [0], [0], [1], [0, 0, 1, 1], [], []>} : vector<256x32xbf16>, vector<32x256xbf16>, vector<256x256xf32> -> vector<256x256xf32>
    %4 = vector.extract_strided_slice %3 {offsets = [0, 0], sizes = [256, 128], strides = [1, 1]} : vector<256x256xf32> to vector<256x128xf32>
    %5 = vector.extract_strided_slice %3 {offsets = [0, 128], sizes = [256, 128], strides = [1, 1]} : vector<256x256xf32> to vector<256x128xf32>
    %c0_3 = arith.constant 0 : index
    %c0_4 = arith.constant 0 : index
    %6 = vector.load %arg3[%c0_3, %c0_4] : memref<1x128xf32, #tpu.memory_space<vmem>>, vector<1x128xf32>
    %7 = vector.broadcast %6 : vector<1x128xf32> to vector<256x128xf32>
    %8 = arith.addf %5, %7 : vector<256x128xf32>
    %cst_5 = arith.constant 0.000000e+00 : f32
    %9 = vector.broadcast %cst_5 : f32 to vector<256x128xf32>
    %10 = arith.cmpf oge, %8, %9 : vector<256x128xf32>
    %cst_6 = arith.constant 0.00999999977 : f32
    %11 = vector.broadcast %cst_6 : f32 to vector<256x128xf32>
    %12 = arith.mulf %11, %8 : vector<256x128xf32>
    %13 = arith.select %10, %8, %12 : vector<256x128xi1>, vector<256x128xf32>
    %14 = arith.truncf %13 : vector<256x128xf32> to vector<256x128xbf16>
    %c0_7 = arith.constant 0 : index
    %c0_8 = arith.constant 0 : index
    %15 = vector.load %arg4[%c0_7, %c0_8] : memref<128x128xbf16, #tpu.memory_space<vmem>>, vector<128x128xbf16>
    %cst_9 = arith.constant dense<0.000000e+00> : vector<256x128xf32>
    %16 = tpu.matmul %14, %15, %cst_9 {dimension_numbers = #tpu.dot_dimension_numbers<[1], [0], [0], [1], [0, 0, 1, 1], [], []>} : vector<256x128xbf16>, vector<128x128xbf16>, vector<256x128xf32> -> vector<256x128xf32>
    %c0_10 = arith.constant 0 : index
    %c0_11 = arith.constant 0 : index
    %17 = vector.load %arg5[%c0_10, %c0_11] : memref<1x128xf32, #tpu.memory_space<vmem>>, vector<1x128xf32>
    %18 = vector.broadcast %17 : vector<1x128xf32> to vector<256x128xf32>
    %19 = arith.addf %16, %18 : vector<256x128xf32>
    %cst_12 = arith.constant 0.000000e+00 : f32
    %20 = vector.broadcast %cst_12 : f32 to vector<256x128xf32>
    %21 = arith.cmpf oge, %19, %20 : vector<256x128xf32>
    %cst_13 = arith.constant 0.00999999977 : f32
    %22 = vector.broadcast %cst_13 : f32 to vector<256x128xf32>
    %23 = arith.mulf %22, %19 : vector<256x128xf32>
    %24 = arith.select %21, %19, %23 : vector<256x128xi1>, vector<256x128xf32>
    %25 = arith.truncf %24 : vector<256x128xf32> to vector<256x128xbf16>
    %c0_14 = arith.constant 0 : index
    %c0_15 = arith.constant 0 : index
    %26 = vector.load %arg6[%c0_14, %c0_15] : memref<128x128xbf16, #tpu.memory_space<vmem>>, vector<128x128xbf16>
    %cst_16 = arith.constant dense<0.000000e+00> : vector<256x128xf32>
    %27 = tpu.matmul %25, %26, %cst_16 {dimension_numbers = #tpu.dot_dimension_numbers<[1], [0], [0], [1], [0, 0, 1, 1], [], []>} : vector<256x128xbf16>, vector<128x128xbf16>, vector<256x128xf32> -> vector<256x128xf32>
    %28 = arith.addf %4, %27 : vector<256x128xf32>
    %c0_17 = arith.constant 0 : index
    %c0_18 = arith.constant 0 : index
    %29 = vector.load %arg7[%c0_17, %c0_18] : memref<1x128xf32, #tpu.memory_space<vmem>>, vector<1x128xf32>
    %30 = vector.broadcast %29 : vector<1x128xf32> to vector<256x128xf32>
    %31 = arith.addf %28, %30 : vector<256x128xf32>
    %32 = vector.extract_strided_slice %31 {offsets = [0, 0], sizes = [256, 32], strides = [1, 1]} : vector<256x128xf32> to vector<256x32xf32>
    %c0_19 = arith.constant 0 : index
    %c0_20 = arith.constant 0 : index
    %33 = vector.load %arg8[%c0_19, %c0_20] : memref<256x32xf32, #tpu.memory_space<vmem>>, vector<256x32xf32>
    tpu.vector_store %arg8[%c0_19, %c0_20], %32 {strides = array<i32>} : memref<256x32xf32, #tpu.memory_space<vmem>>, vector<256x32xf32>,
    return
  }
  func.func @transform_0(%arg0: i32) -> (i32, i32) {
    %c0_i32 = arith.constant 0 : i32
    %c0_i32_0 = arith.constant 0 : i32
    return %arg0, %c0_i32 : i32, i32
  }
  func.func @transform_1(%arg0: i32) -> (i32, i32) {
    %c0_i32 = arith.constant 0 : i32
    %c0_i32_0 = arith.constant 0 : i32
    %c0_i32_1 = arith.constant 0 : i32
    return %c0_i32, %c0_i32_0 : i32, i32
  }
  func.func @transform_2(%arg0: i32) -> (i32, i32) {
    %c0_i32 = arith.constant 0 : i32
    %c0_i32_0 = arith.constant 0 : i32
    %c0_i32_1 = arith.constant 0 : i32
    return %c0_i32, %c0_i32_0 : i32, i32
  }
  func.func @transform_3(%arg0: i32) -> (i32, i32) {
    %c0_i32 = arith.constant 0 : i32
    %c0_i32_0 = arith.constant 0 : i32
    %c0_i32_1 = arith.constant 0 : i32
    return %c0_i32, %c0_i32_0 : i32, i32
  }
  func.func @transform_4(%arg0: i32) -> (i32, i32) {
    %c0_i32 = arith.constant 0 : i32
    %c0_i32_0 = arith.constant 0 : i32
    %c0_i32_1 = arith.constant 0 : i32
    return %c0_i32, %c0_i32_0 : i32, i32
  }
  func.func @transform_5(%arg0: i32) -> (i32, i32) {
    %c0_i32 = arith.constant 0 : i32
    %c0_i32_0 = arith.constant 0 : i32
    %c0_i32_1 = arith.constant 0 : i32
    return %c0_i32, %c0_i32_0 : i32, i32
  }
  func.func @transform_6(%arg0: i32) -> (i32, i32) {
    %c0_i32 = arith.constant 0 : i32
    %c0_i32_0 = arith.constant 0 : i32
    %c0_i32_1 = arith.constant 0 : i32
    return %c0_i32, %c0_i32_0 : i32, i32
  }
  func.func @transform_7(%arg0: i32) -> (i32, i32) {
    %c0_i32 = arith.constant 0 : i32
    %c0_i32_0 = arith.constant 0 : i32
    return %arg0, %c0_i32 : i32, i32
  }
}

</mosaic_0001>

<llo_original>
// kernel: nam_forward.1
$region0: #{nam_forward.1}
  #allocation0 [shape = 'u32[]', space=smem, size = 0x4, offset = 0x4, fixed_abs, tag = 'smem constant byte address 0x4 - core index']
  #allocation1 [shape = 'u32[144,128]{1,0:T(1,128)}', space=vmem, size = 0x12000, scoped, tag = 'internal scratch']
  %s0 = inlined_call_operand.vmem [shape: f32[512,32], index: 0, kind: input, shape index: {}]
  %s1 = inlined_call_operand.vmem [shape: bf16[32,256], index: 1, kind: input, shape index: {}]
  %s2 = inlined_call_operand.vmem [shape: f32[1,128], index: 2, kind: input, shape index: {}]
  %s3 = inlined_call_operand.vmem [shape: bf16[128,128], index: 3, kind: input, shape index: {}]
  %s4 = inlined_call_operand.vmem [shape: f32[1,128], index: 4, kind: input, shape index: {}]
  %s5 = inlined_call_operand.vmem [shape: bf16[128,128], index: 5, kind: input, shape index: {}]
  %s6 = inlined_call_operand.vmem [shape: f32[1,128], index: 6, kind: input, shape index: {}]
  %s7 = inlined_call_operand.vmem [shape: f32[512,32], index: 7, kind: output, shape index: {}]
  %s8 = sld [smem:[#allocation0]]
  $region61: #{nam_forward.1} parent=0
    _
  %s10 = ssub.s32 1, %s8
  %s11 = scalar_select 0, %s10, %s8
  loop: start=0, step=1, limit=4
  $region2: #{nam_forward.1} parent=0 // loop_pre_header
    _
  $region3: #{nam_forward.1} parent=0 // loop_header
    %s13 = sphi 0, %s17
    %p14 = scmp.ge.s32.totalorder %s13, 4
    %s23 = sphi 0, %s25
    %s26 = sphi 0, %s23
    %s27 = sphi 0, %s26
    %s43 = sphi 0, %s27
    %s47 = sphi 0, %s47
    %s49 = sphi 0, %s47
    %s50 = sphi 0, %s49
    %s64 = sphi 0, %s50
    %s68 = sphi 0, %s68
    %s70 = sphi 0, %s68
    %s71 = sphi 0, %s70
    %s85 = sphi 0, %s71
    %s89 = sphi 0, %s89
    %s91 = sphi 0, %s89
    %s92 = sphi 0, %s91
    %s106 = sphi 0, %s92
    %s110 = sphi 0, %s110
    %s112 = sphi 0, %s110
    %s113 = sphi 0, %s112
    %s127 = sphi 0, %s113
    %s131 = sphi 0, %s131
    %s133 = sphi 0, %s131
    %s134 = sphi 0, %s133
    %s148 = sphi 0, %s134
    %s152 = sphi 0, %s152
    %s154 = sphi 0, %s152
    %s155 = sphi 0, %s154
    %s169 = sphi 0, %s155
    %s175 = sphi 0, %s177
    %s178 = sphi 0, %s175
    %s179 = sphi 0, %s178
    %s195 = sphi 0, %s179
  $region4: #{nam_forward.1} parent=0 // loop_header_branch
    %16 = sbr.rel (%p14) target = $region8
  $region5: #{nam_forward.1} parent=0 // loop_body
    %s18 = ssub.s32 %s13, 1
    %s19 = ssub.s32 %s13, 2
    %s20 = sadd.s32 %s13, 1
    %s21 = ssub.s32 %s13, %s20
    %p22 = scmp.eq.s32.totalorder %s21, 0
    %s24 = sadd.s32 %s23, 1
    %s25 = scalar_select %p22, %s23, %s24
    %p28 = pneg %p22
    %p29 = scmp.eq.s32.totalorder %s13, 1
    %p30 = por %p28, %p29
    %p31 = scmp.ne.s32.totalorder %s23, %s26
    %p32 = scmp.eq.s32.totalorder %s13, 0
    %p33 = por %p31, %p32
    %p34 = scmp.ne.s32.totalorder %s23, %s26
    %p35 = scmp.eq.s32.totalorder %s18, 1
    %p36 = por %p34, %p35
    %p37 = scmp.ne.s32.totalorder %s26, %s27
    %p38 = scmp.eq.s32.totalorder %s18, 0
    %p39 = por %p37, %p38
    %p40 = scmp.ne.s32.totalorder %s26, %s27
    %p41 = scmp.eq.s32.totalorder %s19, 1
    %p42 = por %p40, %p41
    %p44 = scmp.ne.s32.totalorder %s27, %s43
    %p45 = scmp.eq.s32.totalorder %s19, 0
    %p46 = por %p44, %p45
    %s48 = sadd.s32 %s47, 1
    %p51 = scmp.eq.s32.totalorder %s13, 1
    %p52 = scmp.ne.s32.totalorder %s47, %s49
    %p53 = scmp.eq.s32.totalorder %s13, 0
    %p54 = por %p52, %p53
    %p55 = scmp.ne.s32.totalorder %s47, %s49
    %p56 = scmp.eq.s32.totalorder %s18, 1
    %p57 = por %p55, %p56
    %p58 = scmp.ne.s32.totalorder %s49, %s50
    %p59 = scmp.eq.s32.totalorder %s18, 0
    %p60 = por %p58, %p59
    %p61 = scmp.ne.s32.totalorder %s49, %s50
    %p62 = scmp.eq.s32.totalorder %s19, 1
    %p63 = por %p61, %p62
    %p65 = scmp.ne.s32.totalorder %s50, %s64
    %p66 = scmp.eq.s32.totalorder %s19, 0
    %p67 = por %p65, %p66
    %s69 = sadd.s32 %s68, 1
    %p72 = scmp.eq.s32.totalorder %s13, 1
    %p73 = scmp.ne.s32.totalorder %s68, %s70
    %p74 = scmp.eq.s32.totalorder %s13, 0
    %p75 = por %p73, %p74
    %p76 = scmp.ne.s32.totalorder %s68, %s70
    %p77 = scmp.eq.s32.totalorder %s18, 1
    %p78 = por %p76, %p77
    %p79 = scmp.ne.s32.totalorder %s70, %s71
    %p80 = scmp.eq.s32.totalorder %s18, 0
    %p81 = por %p79, %p80
    %p82 = scmp.ne.s32.totalorder %s70, %s71
    %p83 = scmp.eq.s32.totalorder %s19, 1
    %p84 = por %p82, %p83
    %p86 = scmp.ne.s32.totalorder %s71, %s85
    %p87 = scmp.eq.s32.totalorder %s19, 0
    %p88 = por %p86, %p87
    %s90 = sadd.s32 %s89, 1
    %p93 = scmp.eq.s32.totalorder %s13, 1
    %p94 = scmp.ne.s32.totalorder %s89, %s91
    %p95 = scmp.eq.s32.totalorder %s13, 0
    %p96 = por %p94, %p95
    %p97 = scmp.ne.s32.totalorder %s89, %s91
    %p98 = scmp.eq.s32.totalorder %s18, 1
    %p99 = por %p97, %p98
    %p100 = scmp.ne.s32.totalorder %s91, %s92
    %p101 = scmp.eq.s32.totalorder %s18, 0
    %p102 = por %p100, %p101
    %p103 = scmp.ne.s32.totalorder %s91, %s92
    %p104 = scmp.eq.s32.totalorder %s19, 1
    %p105 = por %p103, %p104
    %p107 = scmp.ne.s32.totalorder %s92, %s106
    %p108 = scmp.eq.s32.totalorder %s19, 0
    %p109 = por %p107, %p108
    %s111 = sadd.s32 %s110, 1
    %p114 = scmp.eq.s32.totalorder %s13, 1
    %p115 = scmp.ne.s32.totalorder %s110, %s112
    %p116 = scmp.eq.s32.totalorder %s13, 0
    %p117 = por %p115, %p116
    %p118 = scmp.ne.s32.totalorder %s110, %s112
    %p119 = scmp.eq.s32.totalorder %s18, 1
    %p120 = por %p118, %p119
    %p121 = scmp.ne.s32.totalorder %s112, %s113
    %p122 = scmp.eq.s32.totalorder %s18, 0
    %p123 = por %p121, %p122
    %p124 = scmp.ne.s32.totalorder %s112, %s113
    %p125 = scmp.eq.s32.totalorder %s19, 1
    %p126 = por %p124, %p125
    %p128 = scmp.ne.s32.totalorder %s113, %s127
    %p129 = scmp.eq.s32.totalorder %s19, 0
    %p130 = por %p128, %p129
    %s132 = sadd.s32 %s131, 1
    %p135 = scmp.eq.s32.totalorder %s13, 1
    %p136 = scmp.ne.s32.totalorder %s131, %s133
    %p137 = scmp.eq.s32.totalorder %s13, 0
    %p138 = por %p136, %p137
    %p139 = scmp.ne.s32.totalorder %s131, %s133
    %p140 = scmp.eq.s32.totalorder %s18, 1
    %p141 = por %p139, %p140
    %p142 = scmp.ne.s32.totalorder %s133, %s134
    %p143 = scmp.eq.s32.totalorder %s18, 0
    %p144 = por %p142, %p143
    %p145 = scmp.ne.s32.totalorder %s133, %s134
    %p146 = scmp.eq.s32.totalorder %s19, 1
    %p147 = por %p145, %p146
    %p149 = scmp.ne.s32.totalorder %s134, %s148
    %p150 = scmp.eq.s32.totalorder %s19, 0
    %p151 = por %p149, %p150
    %s153 = sadd.s32 %s152, 1
    %p156 = scmp.eq.s32.totalorder %s13, 1
    %p157 = scmp.ne.s32.totalorder %s152, %s154
    %p158 = scmp.eq.s32.totalorder %s13, 0
    %p159 = por %p157, %p158
    %p160 = scmp.ne.s32.totalorder %s152, %s154
    %p161 = scmp.eq.s32.totalorder %s18, 1
    %p162 = por %p160, %p161
    %p163 = scmp.ne.s32.totalorder %s154, %s155
    %p164 = scmp.eq.s32.totalorder %s18, 0
    %p165 = por %p163, %p164
    %p166 = scmp.ne.s32.totalorder %s154, %s155
    %p167 = scmp.eq.s32.totalorder %s19, 1
    %p168 = por %p166, %p167
    %p170 = scmp.ne.s32.totalorder %s155, %s169
    %p171 = scmp.eq.s32.totalorder %s19, 0
    %p172 = por %p170, %p171
    %s173 = ssub.s32 %s13, %s20
    %p174 = scmp.eq.s32.totalorder %s173, 0
    %s176 = sadd.s32 %s175, 1
    %s177 = scalar_select %p174, %s175, %s176
    %p180 = pneg %p174
    %p181 = scmp.eq.s32.totalorder %s13, 1
    %p182 = por %p180, %p181
    %p183 = scmp.ne.s32.totalorder %s175, %s178
    %p184 = scmp.eq.s32.totalorder %s13, 0
    %p185 = por %p183, %p184
    %p186 = scmp.ne.s32.totalorder %s175, %s178
    %p187 = scmp.eq.s32.totalorder %s18, 1
    %p188 = por %p186, %p187
    %p189 = scmp.ne.s32.totalorder %s178, %s179
    %p190 = scmp.eq.s32.totalorder %s18, 0
    %p191 = por %p189, %p190
    %p192 = scmp.ne.s32.totalorder %s178, %s179
    %p193 = scmp.eq.s32.totalorder %s19, 1
    %p194 = por %p192, %p193
    %p196 = scmp.ne.s32.totalorder %s179, %s195
    %p197 = scmp.eq.s32.totalorder %s19, 0
    %p198 = por %p196, %p197
    %p199 = scmp.le.s32.totalorder 1, %s13
    %p200 = scmp.lt.s32.totalorder %s13, 3
    %p201 = pnand %p199, %p200
    %p202 = pneg %p201
    // Predicated region
    $region9: #{nam_forward.1} parent=5 // pred_check
      _
    $region10: #{nam_forward.1} parent=5 // pred_check_branch
      %204 = sbr.rel (%p201) target = $region12
    $region11: #{nam_forward.1} parent=5 // pred_region
      %s205 = ssub.s32 %s13, 1
      // Predicated region
      $region13: #{nam_forward.1} parent=11 // pred_check
        %p206 = pneg %p60
      $region14: #{nam_forward.1} parent=11 // pred_check_branch
        %208 = sbr.rel (%p206) target = $region16
      $region15: #{nam_forward.1} parent=11 // pred_region
        _
      $region16: #{nam_forward.1} parent=11 // pred_fallthru
        _
      // Predicated region
      $region17: #{nam_forward.1} parent=11 // pred_check
        %p209 = pneg %p81
      $region18: #{nam_forward.1} parent=11 // pred_check_branch
        %211 = sbr.rel (%p209) target = $region20
      $region19: #{nam_forward.1} parent=11 // pred_region
        _
      $region20: #{nam_forward.1} parent=11 // pred_fallthru
        _
      // Predicated region
      $region21: #{nam_forward.1} parent=11 // pred_check
        %p212 = pneg %p102
      $region22: #{nam_forward.1} parent=11 // pred_check_branch
        %214 = sbr.rel (%p212) target = $region24
      $region23: #{nam_forward.1} parent=11 // pred_region
        _
      $region24: #{nam_forward.1} parent=11 // pred_fallthru
        _
      // Predicated region
      $region25: #{nam_forward.1} parent=11 // pred_check
        %p215 = pneg %p123
      $region26: #{nam_forward.1} parent=11 // pred_check_branch
        %217 = sbr.rel (%p215) target = $region28
      $region27: #{nam_forward.1} parent=11 // pred_region
        _
      $region28: #{nam_forward.1} parent=11 // pred_fallthru
        _
      // Predicated region
      $region29: #{nam_forward.1} parent=11 // pred_check
        %p218 = pneg %p144
      $region30: #{nam_forward.1} parent=11 // pred_check_branch
        %220 = sbr.rel (%p218) target = $region32
      $region31: #{nam_forward.1} parent=11 // pred_region
        _
      $region32: #{nam_forward.1} parent=11 // pred_fallthru
        _
      // Predicated region
      $region33: #{nam_forward.1} parent=11 // pred_check
        %p221 = pneg %p165
      $region34: #{nam_forward.1} parent=11 // pred_check_branch
        %223 = sbr.rel (%p221) target = $region36
      $region35: #{nam_forward.1} parent=11 // pred_region
        _
      $region36: #{nam_forward.1} parent=11 // pred_fallthru
        _
    $region12: #{nam_forward.1} parent=5 // pred_fallthru
      _
    %p224 = scmp.lt.s32.totalorder %s13, 2
    // Predicated region
    $region37: #{nam_forward.1} parent=5 // pred_check
      %p225 = pneg %p224
    $region38: #{nam_forward.1} parent=5 // pred_check_branch
      %227 = sbr.rel (%p225) target = $region40
    $region39: #{nam_forward.1} parent=5 // pred_region
      // Predicated region
      $region41: #{nam_forward.1} parent=39 // pred_check
        %p228 = pneg %p33
      $region42: #{nam_forward.1} parent=39 // pred_check_branch
        %230 = sbr.rel (%p228) target = $region44
      $region43: #{nam_forward.1} parent=39 // pred_region
        %s231 = smul.u32 32, %s13
        %p232 = scmp.lt.s32.totalorder %s231, 63
        %s233 = scalar_select %p232, %s231, 63
        %s234 = smul.addr %s233, 8
        %s235 = scalar_lea.vmem %s0, %s234
        %s236 = smul.u32 32, %s13
      $region44: #{nam_forward.1} parent=39 // pred_fallthru
        _
    $region40: #{nam_forward.1} parent=5 // pred_fallthru
      _
    %p237 = scmp.le.s32.totalorder 1, %s13
    %p238 = scmp.lt.s32.totalorder %s13, 3
    %p239 = pnand %p237, %p238
    %p240 = pneg %p239
    // Predicated region
    $region45: #{nam_forward.1} parent=5 // pred_check
      _
    $region46: #{nam_forward.1} parent=5 // pred_check_branch
      %242 = sbr.rel (%p239) target = $region48
    $region47: #{nam_forward.1} parent=5 // pred_region
      %s243 = ssub.s32 %s13, 1
      %s244 = smul.u32 32, %s18
      %p245 = scmp.lt.s32.totalorder %s244, 63
      %s246 = scalar_select %p245, %s244, 63
      %s247 = smul.addr %s246, 8
      %s248 = scalar_lea.vmem %s0, %s247
      %p249 = pneg %p39
      %p250 = pneg %p36
      %p251 = pneg %p60
      %p252 = pneg %p57
      %p253 = pneg %p81
      %p254 = pneg %p78
      %p255 = pneg %p102
      %p256 = pneg %p99
      %p257 = pneg %p123
      %p258 = pneg %p120
      %p259 = pneg %p144
      %p260 = pneg %p141
      %p261 = pneg %p165
      %p262 = pneg %p162
      %p263 = pneg %p191
      %p264 = pneg %p188
      %s265 = smul.u32 32, %s18
      %p266 = scmp.lt.s32.totalorder %s265, 63
      %s267 = scalar_select %p266, %s265, 63
      %s268 = smul.addr %s267, 8
      %s269 = scalar_lea.vmem %s7, %s268
      %s270 = smul.u32 32, %s18
      %p271 = scmp.lt.s32.totalorder %s270, 63
      %s272 = scalar_select %p271, %s270, 63
      %s273 = smul.addr %s272, 8
      %s274 = scalar_lea.vmem %s0, %s273
      %s275 = smul.u32 32, %s18
      %s276 = smul.u32 32, %s18
      %p277 = scmp.lt.s32.totalorder %s276, 63
      %s278 = scalar_select %p277, %s276, 63
      %s279 = smul.addr %s278, 8
      %s280 = scalar_lea.vmem %s7, %s279
      %s281 = smul.u32 32, %s18
      %v283 = vld [vmem:[%s274] sm:$0xff]
      %v284 = vld [vmem:[%s274 + $0x8] sm:$0xff]
      %v285 = vld [vmem:[%s274 + $0x10] sm:$0xff]
      %v286 = vld [vmem:[%s274 + $0x18] sm:$0xff]
      %v287 = vld [vmem:[%s274 + $0x20] sm:$0xff]
      %v288 = vld [vmem:[%s274 + $0x28] sm:$0xff]
      %v289 = vld [vmem:[%s274 + $0x30] sm:$0xff]
      %v290 = vld [vmem:[%s274 + $0x38] sm:$0xff]
      %v291 = vld [vmem:[%s274 + $0x40] sm:$0xff]
      %v292 = vld [vmem:[%s274 + $0x48] sm:$0xff]
      %v293 = vld [vmem:[%s274 + $0x50] sm:$0xff]
      %v294 = vld [vmem:[%s274 + $0x58] sm:$0xff]
      %v295 = vld [vmem:[%s274 + $0x60] sm:$0xff]
      %v296 = vld [vmem:[%s274 + $0x68] sm:$0xff]
      %v297 = vld [vmem:[%s274 + $0x70] sm:$0xff]
      %v298 = vld [vmem:[%s274 + $0x78] sm:$0xff]
      %v299 = vld [vmem:[%s274 + $0x80] sm:$0xff]
      %v300 = vld [vmem:[%s274 + $0x88] sm:$0xff]
      %v301 = vld [vmem:[%s274 + $0x90] sm:$0xff]
      %v302 = vld [vmem:[%s274 + $0x98] sm:$0xff]
      %v303 = vld [vmem:[%s274 + $0xa0] sm:$0xff]
      %v304 = vld [vmem:[%s274 + $0xa8] sm:$0xff]
      %v305 = vld [vmem:[%s274 + $0xb0] sm:$0xff]
      %v306 = vld [vmem:[%s274 + $0xb8] sm:$0xff]
      %v307 = vld [vmem:[%s274 + $0xc0] sm:$0xff]
      %v308 = vld [vmem:[%s274 + $0xc8] sm:$0xff]
      %v309 = vld [vmem:[%s274 + $0xd0] sm:$0xff]
      %v310 = vld [vmem:[%s274 + $0xd8] sm:$0xff]
      %v311 = vld [vmem:[%s274 + $0xe0] sm:$0xff]
      %v312 = vld [vmem:[%s274 + $0xe8] sm:$0xff]
      %v313 = vld [vmem:[%s274 + $0xf0] sm:$0xff]
      %v314 = vld [vmem:[%s274 + $0xf8] sm:$0xff]
      %v315 = vpack.c.bf16 %v284, %v283
      %v316 = vpack.c.bf16 %v286, %v285
      %v317 = vpack.c.bf16 %v288, %v287
      %v318 = vpack.c.bf16 %v290, %v289
      %v319 = vpack.c.bf16 %v292, %v291
      %v320 = vpack.c.bf16 %v294, %v293
      %v321 = vpack.c.bf16 %v296, %v295
      %v322 = vpack.c.bf16 %v298, %v297
      %v323 = vpack.c.bf16 %v300, %v299
      %v324 = vpack.c.bf16 %v302, %v301
      %v325 = vpack.c.bf16 %v304, %v303
      %v326 = vpack.c.bf16 %v306, %v305
      %v327 = vpack.c.bf16 %v308, %v307
      %v328 = vpack.c.bf16 %v310, %v309
      %v329 = vpack.c.bf16 %v312, %v311
      %v330 = vpack.c.bf16 %v314, %v313
      %v331 = vld [vmem:[%s1] sm:$0xff]
      %v332 = vld [vmem:[%s1 + $0x8] sm:$0xff]
      %v333 = vld [vmem:[%s1 + $0x10] sm:$0xff]
      %v334 = vld [vmem:[%s1 + $0x18] sm:$0xff]
      %v339 = vunpack.c.l.b16 %v331
      %v340 = vunpack.c.h.b16 %v331
      %v341 = vunpack.c.l.b16 %v332
      %v342 = vunpack.c.h.b16 %v332
      %v343 = vunpack.c.l.b16 %v333
      %v344 = vunpack.c.h.b16 %v333
      %v345 = vunpack.c.l.b16 %v334
      %v346 = vunpack.c.h.b16 %v334
      %v347 = vpack.c.b16 %v341, %v339
      %v348 = vpack.c.b16 %v342, %v340
      %v349 = vpack.c.b16 %v345, %v343
      %v350 = vpack.c.b16 %v346, %v344
      %vm355 = vcmask 261120
      %v357 = vsel %vm355, %v315, 0
      %v360 = vsel %vm355, %v316, 0
      %v363 = vsel %vm355, %v317, 0
      %v366 = vsel %vm355, %v318, 0
      %v369 = vsel %vm355, %v319, 0
      %v372 = vsel %vm355, %v320, 0
      %v375 = vsel %vm355, %v321, 0
      %v378 = vsel %vm355, %v322, 0
      %v381 = vsel %vm355, %v323, 0
      %v384 = vsel %vm355, %v324, 0
      %v387 = vsel %vm355, %v325, 0
      %v390 = vsel %vm355, %v326, 0
      %v393 = vsel %vm355, %v327, 0
      %v396 = vsel %vm355, %v328, 0
      %v399 = vsel %vm355, %v329, 0
      %v402 = vsel %vm355, %v330, 0
      %404 = vmatprep.subr.bf16.mxu0 %v348
      %405 = vmatpush1.bf16.msra.mxu0 %v347
      %406 = vmatprep.subr.bf16.mxu0 %v350
      %407 = vmatpush1.bf16.msra.mxu0 %v349
      %408 = vmatprep.subr.bf16.mxu0 0
      %409 = vmatpush1.bf16.msra.mxu0 0
      %410 = vmatprep.subr.bf16.mxu0 0
      %411 = vmatpush1.bf16.msra.mxu0 0
      %412 = vmatprep.subr.bf16.mxu0 0
      %413 = vmatpush1.bf16.msra.mxu0 0
      %414 = vmatprep.subr.bf16.mxu0 0
      %415 = vmatpush1.bf16.msra.mxu0 0
      %416 = vmatprep.subr.bf16.mxu0 0
      %417 = vmatpush1.bf16.msra.mxu0 0
      %418 = vmatprep.subr.bf16.mxu0 0
      %419 = vmatpush1.bf16.msra.mxu0 0
      %420 = vmatprep.subr.bf16.mxu0 0
      %421 = vmatpush1.bf16.msra.mxu0 0
      %422 = vmatprep.subr.bf16.mxu0 0
      %423 = vmatpush1.bf16.msra.mxu0 0
      %424 = vmatprep.subr.bf16.mxu0 0
      %425 = vmatpush1.bf16.msra.mxu0 0
      %426 = vmatprep.subr.bf16.mxu0 0
      %427 = vmatpush1.bf16.msra.mxu0 0
      %428 = vmatprep.subr.bf16.mxu0 0
      %429 = vmatpush1.bf16.msra.mxu0 0
      %430 = vmatprep.subr.bf16.mxu0 0
      %431 = vmatpush1.bf16.msra.mxu0 0
      %432 = vmatprep.subr.bf16.mxu0 0
      %433 = vmatpush1.bf16.msra.mxu0 0
      %434 = vmatprep.subr.bf16.mxu0 0
      %435 = vmatpush1.bf16.msra.mxu0 0
      %436 = vmatprep.mubr.bf16.mxu0 0
      %437 = vmatmul.mubr.bf16.gmra.mrb[0].mxu0 %v357
      %v438 = vpop.f32.mrb[0].mxu0
      %v439 = vadd.f32 0.0, %v438
      %v440 = vpop.f32.mrb[0].mxu0
      %v441 = vadd.f32 0.0, %v440
      %v442 = vpop.f32.mrb[0].mxu0
      %v443 = vadd.f32 0.0, %v442
      %v444 = vpop.f32.mrb[0].mxu0
      %v445 = vadd.f32 0.0, %v444
      %446 = vmatprep.mubr.bf16.mxu0 0
      %447 = vmatmul.mubr.bf16.gmra.mrb[0].mxu0 %v360
      %v448 = vpop.f32.mrb[0].mxu0
      %v449 = vadd.f32 0.0, %v448
      %v450 = vpop.f32.mrb[0].mxu0
      %v451 = vadd.f32 0.0, %v450
      %v452 = vpop.f32.mrb[0].mxu0
      %v453 = vadd.f32 0.0, %v452
      %v454 = vpop.f32.mrb[0].mxu0
      %v455 = vadd.f32 0.0, %v454
      %456 = vmatprep.mubr.bf16.mxu0 0
      %457 = vmatmul.mubr.bf16.gmra.mrb[0].mxu0 %v363
      %v458 = vpop.f32.mrb[0].mxu0
      %v459 = vadd.f32 0.0, %v458
      %v460 = vpop.f32.mrb[0].mxu0
      %v461 = vadd.f32 0.0, %v460
      %v462 = vpop.f32.mrb[0].mxu0
      %v463 = vadd.f32 0.0, %v462
      %v464 = vpop.f32.mrb[0].mxu0
      %v465 = vadd.f32 0.0, %v464
      %466 = vmatprep.mubr.bf16.mxu0 0
      %467 = vmatmul.mubr.bf16.gmra.mrb[0].mxu0 %v366
      %v468 = vpop.f32.mrb[0].mxu0
      %v469 = vadd.f32 0.0, %v468
      %v470 = vpop.f32.mrb[0].mxu0
      %v471 = vadd.f32 0.0, %v470
      %v472 = vpop.f32.mrb[0].mxu0
      %v473 = vadd.f32 0.0, %v472
      %v474 = vpop.f32.mrb[0].mxu0
      %v475 = vadd.f32 0.0, %v474
      %476 = vmatprep.mubr.bf16.mxu0 0
      %477 = vmatmul.mubr.bf16.gmra.mrb[0].mxu0 %v369
      %v478 = vpop.f32.mrb[0].mxu0
      %v479 = vadd.f32 0.0, %v478
      %v480 = vpop.f32.mrb[0].mxu0
      %v481 = vadd.f32 0.0, %v480
      %v482 = vpop.f32.mrb[0].mxu0
      %v483 = vadd.f32 0.0, %v482
      %v484 = vpop.f32.mrb[0].mxu0
      %v485 = vadd.f32 0.0, %v484
      %486 = vmatprep.mubr.bf16.mxu0 0
      %487 = vmatmul.mubr.bf16.gmra.mrb[0].mxu0 %v372
      %v488 = vpop.f32.mrb[0].mxu0
      %v489 = vadd.f32 0.0, %v488
      %v490 = vpop.f32.mrb[0].mxu0
      %v491 = vadd.f32 0.0, %v490
      %v492 = vpop.f32.mrb[0].mxu0
      %v493 = vadd.f32 0.0, %v492
      %v494 = vpop.f32.mrb[0].mxu0
      %v495 = vadd.f32 0.0, %v494
      %496 = vmatprep.mubr.bf16.mxu0 0
      %497 = vmatmul.mubr.bf16.gmra.mrb[0].mxu0 %v375
      %v498 = vpop.f32.mrb[0].mxu0
      %v499 = vadd.f32 0.0, %v498
      %v500 = vpop.f32.mrb[0].mxu0
      %v501 = vadd.f32 0.0, %v500
      %v502 = vpop.f32.mrb[0].mxu0
      %v503 = vadd.f32 0.0, %v502
      %v504 = vpop.f32.mrb[0].mxu0
      %v505 = vadd.f32 0.0, %v504
      %506 = vmatprep.mubr.bf16.mxu0 0
      %507 = vmatmul.mubr.bf16.gmra.mrb[0].mxu0 %v378
      %v508 = vpop.f32.mrb[0].mxu0
      %v509 = vadd.f32 0.0, %v508
      %v510 = vpop.f32.mrb[0].mxu0
      %v511 = vadd.f32 0.0, %v510
      %v512 = vpop.f32.mrb[0].mxu0
      %v513 = vadd.f32 0.0, %v512
      %v514 = vpop.f32.mrb[0].mxu0
      %v515 = vadd.f32 0.0, %v514
      %516 = vmatprep.mubr.bf16.mxu0 0
      %517 = vmatmul.mubr.bf16.gmra.mrb[0].mxu0 %v381
      %v518 = vpop.f32.mrb[0].mxu0
      %v519 = vadd.f32 0.0, %v518
      %v520 = vpop.f32.mrb[0].mxu0
      %v521 = vadd.f32 0.0, %v520
      %v522 = vpop.f32.mrb[0].mxu0
      %v523 = vadd.f32 0.0, %v522
      %v524 = vpop.f32.mrb[0].mxu0
      %v525 = vadd.f32 0.0, %v524
      %526 = vmatprep.mubr.bf16.mxu0 0
      %527 = vmatmul.mubr.bf16.gmra.mrb[0].mxu0 %v384
      %v528 = vpop.f32.mrb[0].mxu0
      %v529 = vadd.f32 0.0, %v528
      %v530 = vpop.f32.mrb[0].mxu0
      %v531 = vadd.f32 0.0, %v530
      %v532 = vpop.f32.mrb[0].mxu0
      %v533 = vadd.f32 0.0, %v532
      %v534 = vpop.f32.mrb[0].mxu0
      %v535 = vadd.f32 0.0, %v534
      %536 = vmatprep.mubr.bf16.mxu0 0
      %537 = vmatmul.mubr.bf16.gmra.mrb[0].mxu0 %v387
      %v538 = vpop.f32.mrb[0].mxu0
      %v539 = vadd.f32 0.0, %v538
      %v540 = vpop.f32.mrb[0].mxu0
      %v541 = vadd.f32 0.0, %v540
      %v542 = vpop.f32.mrb[0].mxu0
      %v543 = vadd.f32 0.0, %v542
      %v544 = vpop.f32.mrb[0].mxu0
      %v545 = vadd.f32 0.0, %v544
      %546 = vmatprep.mubr.bf16.mxu0 0
      %547 = vmatmul.mubr.bf16.gmra.mrb[0].mxu0 %v390
      %v548 = vpop.f32.mrb[0].mxu0
      %v549 = vadd.f32 0.0, %v548
      %v550 = vpop.f32.mrb[0].mxu0
      %v551 = vadd.f32 0.0, %v550
      %v552 = vpop.f32.mrb[0].mxu0
      %v553 = vadd.f32 0.0, %v552
      %v554 = vpop.f32.mrb[0].mxu0
      %v555 = vadd.f32 0.0, %v554
      %556 = vmatprep.mubr.bf16.mxu0 0
      %557 = vmatmul.mubr.bf16.gmra.mrb[0].mxu0 %v393
      %v558 = vpop.f32.mrb[0].mxu0
      %v559 = vadd.f32 0.0, %v558
      %v560 = vpop.f32.mrb[0].mxu0
      %v561 = vadd.f32 0.0, %v560
      %v562 = vpop.f32.mrb[0].mxu0
      %v563 = vadd.f32 0.0, %v562
      %v564 = vpop.f32.mrb[0].mxu0
      %v565 = vadd.f32 0.0, %v564
      %566 = vmatprep.mubr.bf16.mxu0 0
      %567 = vmatmul.mubr.bf16.gmra.mrb[0].mxu0 %v396
      %v568 = vpop.f32.mrb[0].mxu0
      %v569 = vadd.f32 0.0, %v568
      %v570 = vpop.f32.mrb[0].mxu0
      %v571 = vadd.f32 0.0, %v570
      %v572 = vpop.f32.mrb[0].mxu0
      %v573 = vadd.f32 0.0, %v572
      %v574 = vpop.f32.mrb[0].mxu0
      %v575 = vadd.f32 0.0, %v574
      %576 = vmatprep.mubr.bf16.mxu0 0
      %577 = vmatmul.mubr.bf16.gmra.mrb[0].mxu0 %v399
      %v578 = vpop.f32.mrb[0].mxu0
      %v579 = vadd.f32 0.0, %v578
      %v580 = vpop.f32.mrb[0].mxu0
      %v581 = vadd.f32 0.0, %v580
      %v582 = vpop.f32.mrb[0].mxu0
      %v583 = vadd.f32 0.0, %v582
      %v584 = vpop.f32.mrb[0].mxu0
      %v585 = vadd.f32 0.0, %v584
      %586 = vmatprep.mubr.bf16.mxu0 0
      %587 = vmatmul.mubr.bf16.gmra.mrb[0].mxu0 %v402
      %v588 = vpop.f32.mrb[0].mxu0
      %v589 = vadd.f32 0.0, %v588
      %v590 = vpop.f32.mrb[0].mxu0
      %v591 = vadd.f32 0.0, %v590
      %v592 = vpop.f32.mrb[0].mxu0
      %v593 = vadd.f32 0.0, %v592
      %v594 = vpop.f32.mrb[0].mxu0
      %v595 = vadd.f32 0.0, %v594
      %596 = vdwg.mxu0
      %v597 = vld [vmem:[%s2] sm:$0x1]
      %v599 = vlaneseq
      %v600 = vshrl.u32 %v599, 7
      %v601 = vsub.s32 0, %v600
      %v602 = vrot.slane %v597, %v601
      %v604 = vadd.f32 %v441, %v602
      %v605 = vadd.f32 %v445, %v602
      %v606 = vadd.f32 %v451, %v602
      %v607 = vadd.f32 %v455, %v602
      %v608 = vadd.f32 %v461, %v602
      %v609 = vadd.f32 %v465, %v602
      %v610 = vadd.f32 %v471, %v602
      %v611 = vadd.f32 %v475, %v602
      %v612 = vadd.f32 %v481, %v602
      %v613 = vadd.f32 %v485, %v602
      %v614 = vadd.f32 %v491, %v602
      %v615 = vadd.f32 %v495, %v602
      %v616 = vadd.f32 %v501, %v602
      %v617 = vadd.f32 %v505, %v602
      %v618 = vadd.f32 %v511, %v602
      %v619 = vadd.f32 %v515, %v602
      %v620 = vadd.f32 %v521, %v602
      %v621 = vadd.f32 %v525, %v602
      %v622 = vadd.f32 %v531, %v602
      %v623 = vadd.f32 %v535, %v602
      %v624 = vadd.f32 %v541, %v602
      %v625 = vadd.f32 %v545, %v602
      %v626 = vadd.f32 %v551, %v602
      %v627 = vadd.f32 %v555, %v602
      %v628 = vadd.f32 %v561, %v602
      %v629 = vadd.f32 %v565, %v602
      %v630 = vadd.f32 %v571, %v602
      %v631 = vadd.f32 %v575, %v602
      %v632 = vadd.f32 %v581, %v602
      %v633 = vadd.f32 %v585, %v602
      %v634 = vadd.f32 %v591, %v602
      %v635 = vadd.f32 %v595, %v602
      %vm636 = vcmp.ge.f32.partialorder %v604, 0.0
      %vm637 = vcmp.ge.f32.partialorder %v605, 0.0
      %vm638 = vcmp.ge.f32.partialorder %v606, 0.0
      %vm639 = vcmp.ge.f32.partialorder %v607, 0.0
      %vm640 = vcmp.ge.f32.partialorder %v608, 0.0
      %vm641 = vcmp.ge.f32.partialorder %v609, 0.0
      %vm642 = vcmp.ge.f32.partialorder %v610, 0.0
      %vm643 = vcmp.ge.f32.partialorder %v611, 0.0
      %vm644 = vcmp.ge.f32.partialorder %v612, 0.0
      %vm645 = vcmp.ge.f32.partialorder %v613, 0.0
      %vm646 = vcmp.ge.f32.partialorder %v614, 0.0
      %vm647 = vcmp.ge.f32.partialorder %v615, 0.0
      %vm648 = vcmp.ge.f32.partialorder %v616, 0.0
      %vm649 = vcmp.ge.f32.partialorder %v617, 0.0
      %vm650 = vcmp.ge.f32.partialorder %v618, 0.0
      %vm651 = vcmp.ge.f32.partialorder %v619, 0.0
      %vm652 = vcmp.ge.f32.partialorder %v620, 0.0
      %vm653 = vcmp.ge.f32.partialorder %v621, 0.0
      %vm654 = vcmp.ge.f32.partialorder %v622, 0.0
      %vm655 = vcmp.ge.f32.partialorder %v623, 0.0
      %vm656 = vcmp.ge.f32.partialorder %v624, 0.0
      %vm657 = vcmp.ge.f32.partialorder %v625, 0.0
      %vm658 = vcmp.ge.f32.partialorder %v626, 0.0
      %vm659 = vcmp.ge.f32.partialorder %v627, 0.0
      %vm660 = vcmp.ge.f32.partialorder %v628, 0.0
      %vm661 = vcmp.ge.f32.partialorder %v629, 0.0
      %vm662 = vcmp.ge.f32.partialorder %v630, 0.0
      %vm663 = vcmp.ge.f32.partialorder %v631, 0.0
      %vm664 = vcmp.ge.f32.partialorder %v632, 0.0
      %vm665 = vcmp.ge.f32.partialorder %v633, 0.0
      %vm666 = vcmp.ge.f32.partialorder %v634, 0.0
      %vm667 = vcmp.ge.f32.partialorder %v635, 0.0
      %v668 = vmul.f32 %v604, 0.01
      %v669 = vmul.f32 %v605, 0.01
      %v670 = vmul.f32 %v606, 0.01
      %v671 = vmul.f32 %v607, 0.01
      %v672 = vmul.f32 %v608, 0.01
      %v673 = vmul.f32 %v609, 0.01
      %v674 = vmul.f32 %v610, 0.01
      %v675 = vmul.f32 %v611, 0.01
      %v676 = vmul.f32 %v612, 0.01
      %v677 = vmul.f32 %v613, 0.01
      %v678 = vmul.f32 %v614, 0.01
      %v679 = vmul.f32 %v615, 0.01
      %v680 = vmul.f32 %v616, 0.01
      %v681 = vmul.f32 %v617, 0.01
      %v682 = vmul.f32 %v618, 0.01
      %v683 = vmul.f32 %v619, 0.01
      %v684 = vmul.f32 %v620, 0.01
      %v685 = vmul.f32 %v621, 0.01
      %v686 = vmul.f32 %v622, 0.01
      %v687 = vmul.f32 %v623, 0.01
      %v688 = vmul.f32 %v624, 0.01
      %v689 = vmul.f32 %v625, 0.01
      %v690 = vmul.f32 %v626, 0.01
      %v691 = vmul.f32 %v627, 0.01
      %v692 = vmul.f32 %v628, 0.01
      %v693 = vmul.f32 %v629, 0.01
      %v694 = vmul.f32 %v630, 0.01
      %v695 = vmul.f32 %v631, 0.01
      %v696 = vmul.f32 %v632, 0.01
      %v697 = vmul.f32 %v633, 0.01
      %v698 = vmul.f32 %v634, 0.01
      %v699 = vmul.f32 %v635, 0.01
      %v700 = vsel %vm636, %v604, %v668
      %v701 = vsel %vm637, %v605, %v669
      %v702 = vsel %vm638, %v606, %v670
      %v703 = vsel %vm639, %v607, %v671
      %v704 = vsel %vm640, %v608, %v672
      %v705 = vsel %vm641, %v609, %v673
      %v706 = vsel %vm642, %v610, %v674
      %v707 = vsel %vm643, %v611, %v675
      %v708 = vsel %vm644, %v612, %v676
      %v709 = vsel %vm645, %v613, %v677
      %v710 = vsel %vm646, %v614, %v678
      %v711 = vsel %vm647, %v615, %v679
      %v712 = vsel %vm648, %v616, %v680
      %v713 = vsel %vm649, %v617, %v681
      %v714 = vsel %vm650, %v618, %v682
      %v715 = vsel %vm651, %v619, %v683
      %v716 = vsel %vm652, %v620, %v684
      %v717 = vsel %vm653, %v621, %v685
      %v718 = vsel %vm654, %v622, %v686
      %v719 = vsel %vm655, %v623, %v687
      %v720 = vsel %vm656, %v624, %v688
      %v721 = vsel %vm657, %v625, %v689
      %v722 = vsel %vm658, %v626, %v690
      %v723 = vsel %vm659, %v627, %v691
      %v724 = vsel %vm660, %v628, %v692
      %v725 = vsel %vm661, %v629, %v693
      %v726 = vsel %vm662, %v630, %v694
      %v727 = vsel %vm663, %v631, %v695
      %v728 = vsel %vm664, %v632, %v696
      %v729 = vsel %vm665, %v633, %v697
      %v730 = vsel %vm666, %v634, %v698
      %v731 = vsel %vm667, %v635, %v699
      %v732 = vpack.c.bf16 %v701, %v700
      %v733 = vpack.c.bf16 %v703, %v702
      %v734 = vpack.c.bf16 %v705, %v704
      %v735 = vpack.c.bf16 %v707, %v706
      %v736 = vpack.c.bf16 %v709, %v708
      %v737 = vpack.c.bf16 %v711, %v710
      %v738 = vpack.c.bf16 %v713, %v712
      %v739 = vpack.c.bf16 %v715, %v714
      %v740 = vpack.c.bf16 %v717, %v716
      %v741 = vpack.c.bf16 %v719, %v718
      %v742 = vpack.c.bf16 %v721, %v720
      %v743 = vpack.c.bf16 %v723, %v722
      %v744 = vpack.c.bf16 %v725, %v724
      %v745 = vpack.c.bf16 %v727, %v726
      %v746 = vpack.c.bf16 %v729, %v728
      %v747 = vpack.c.bf16 %v731, %v730
      %v748 = vld [vmem:[%s3] sm:$0xf]
      %v749 = vld [vmem:[%s3 + $0x4] sm:$0xf]
      %v750 = vld [vmem:[%s3 + $0x8] sm:$0xf]
      %v751 = vld [vmem:[%s3 + $0xc] sm:$0xf]
      %v752 = vld [vmem:[%s3 + $0x10] sm:$0xf]
      %v753 = vld [vmem:[%s3 + $0x14] sm:$0xf]
      %v754 = vld [vmem:[%s3 + $0x18] sm:$0xf]
      %v755 = vld [vmem:[%s3 + $0x1c] sm:$0xf]
      %v756 = vld [vmem:[%s3 + $0x20] sm:$0xf]
      %v757 = vld [vmem:[%s3 + $0x24] sm:$0xf]
      %v758 = vld [vmem:[%s3 + $0x28] sm:$0xf]
      %v759 = vld [vmem:[%s3 + $0x2c] sm:$0xf]
      %v760 = vld [vmem:[%s3 + $0x30] sm:$0xf]
      %v761 = vld [vmem:[%s3 + $0x34] sm:$0xf]
      %v762 = vld [vmem:[%s3 + $0x38] sm:$0xf]
      %v763 = vld [vmem:[%s3 + $0x3c] sm:$0xf]
      %v764 = vld [vmem:[%s4] sm:$0x1]
      %v766 = vlaneseq
      %v767 = vshrl.u32 %v766, 7
      %v768 = vsub.s32 0, %v767
      %v769 = vrot.slane %v764, %v768
      %v787 = vunpack.c.l.b16 %v748
      %v788 = vunpack.c.l.b16 %v749
      %v789 = vunpack.c.l.b16 %v750
      %v790 = vunpack.c.l.b16 %v751
      %v791 = vunpack.c.l.b16 %v752
      %v792 = vunpack.c.l.b16 %v753
      %v793 = vunpack.c.l.b16 %v754
      %v794 = vunpack.c.l.b16 %v755
      %v795 = vunpack.c.l.b16 %v756
      %v796 = vunpack.c.l.b16 %v757
      %v797 = vunpack.c.l.b16 %v758
      %v798 = vunpack.c.l.b16 %v759
      %v799 = vunpack.c.l.b16 %v760
      %v800 = vunpack.c.l.b16 %v761
      %v801 = vunpack.c.l.b16 %v762
      %v802 = vunpack.c.l.b16 %v763
      %v803 = vpack.c.b16 %v788, %v787
      %v804 = vpack.c.b16 %v790, %v789
      %v805 = vpack.c.b16 %v792, %v791
      %v806 = vpack.c.b16 %v794, %v793
      %v807 = vpack.c.b16 %v796, %v795
      %v808 = vpack.c.b16 %v798, %v797
      %v809 = vpack.c.b16 %v800, %v799
      %v810 = vpack.c.b16 %v802, %v801
      %819 = vmatprep.subr.bf16.mxu0 0
      %820 = vmatpush1.bf16.msra.mxu0 %v803
      %821 = vmatprep.subr.bf16.mxu0 0
      %822 = vmatpush1.bf16.msra.mxu0 %v804
      %823 = vmatprep.subr.bf16.mxu0 0
      %824 = vmatpush1.bf16.msra.mxu0 %v805
      %825 = vmatprep.subr.bf16.mxu0 0
      %826 = vmatpush1.bf16.msra.mxu0 %v806
      %827 = vmatprep.subr.bf16.mxu0 0
      %828 = vmatpush1.bf16.msra.mxu0 %v807
      %829 = vmatprep.subr.bf16.mxu0 0
      %830 = vmatpush1.bf16.msra.mxu0 %v808
      %831 = vmatprep.subr.bf16.mxu0 0
      %832 = vmatpush1.bf16.msra.mxu0 %v809
      %833 = vmatprep.subr.bf16.mxu0 0
      %834 = vmatpush1.bf16.msra.mxu0 %v810
      %835 = vmatprep.subr.bf16.mxu0 0
      %836 = vmatpush1.bf16.msra.mxu0 0
      %837 = vmatprep.subr.bf16.mxu0 0
      %838 = vmatpush1.bf16.msra.mxu0 0
      %839 = vmatprep.subr.bf16.mxu0 0
      %840 = vmatpush1.bf16.msra.mxu0 0
      %841 = vmatprep.subr.bf16.mxu0 0
      %842 = vmatpush1.bf16.msra.mxu0 0
      %843 = vmatprep.subr.bf16.mxu0 0
      %844 = vmatpush1.bf16.msra.mxu0 0
      %845 = vmatprep.subr.bf16.mxu0 0
      %846 = vmatpush1.bf16.msra.mxu0 0
      %847 = vmatprep.subr.bf16.mxu0 0
      %848 = vmatpush1.bf16.msra.mxu0 0
      %849 = vmatprep.subr.bf16.mxu0 0
      %850 = vmatpush1.bf16.msra.mxu0 0
      %851 = vmatprep.mubr.bf16.mxu0 0
      %852 = vmatmul.mubr.bf16.gmra.mrb[0].mxu0 %v732
      %v853 = vpop.f32.mrb[0].mxu0
      %v854 = vadd.f32 %v769, %v853
      %v855 = vpop.f32.mrb[0].mxu0
      %v856 = vpop.f32.mrb[0].mxu0
      %v857 = vadd.f32 %v769, %v856
      %v858 = vpop.f32.mrb[0].mxu0
      %859 = vmatprep.mubr.bf16.mxu0 0
      %860 = vmatmul.mubr.bf16.gmra.mrb[0].mxu0 %v733
      %v861 = vpop.f32.mrb[0].mxu0
      %v862 = vadd.f32 %v769, %v861
      %v863 = vpop.f32.mrb[0].mxu0
      %v864 = vpop.f32.mrb[0].mxu0
      %v865 = vadd.f32 %v769, %v864
      %v866 = vpop.f32.mrb[0].mxu0
      %867 = vmatprep.mubr.bf16.mxu0 0
      %868 = vmatmul.mubr.bf16.gmra.mrb[0].mxu0 %v734
      %v869 = vpop.f32.mrb[0].mxu0
      %v870 = vadd.f32 %v769, %v869
      %v871 = vpop.f32.mrb[0].mxu0
      %v872 = vpop.f32.mrb[0].mxu0
      %v873 = vadd.f32 %v769, %v872
      %v874 = vpop.f32.mrb[0].mxu0
      %875 = vmatprep.mubr.bf16.mxu0 0
      %876 = vmatmul.mubr.bf16.gmra.mrb[0].mxu0 %v735
      %v877 = vpop.f32.mrb[0].mxu0
      %v878 = vadd.f32 %v769, %v877
      %v879 = vpop.f32.mrb[0].mxu0
      %v880 = vpop.f32.mrb[0].mxu0
      %v881 = vadd.f32 %v769, %v880
      %v882 = vpop.f32.mrb[0].mxu0
      %883 = vmatprep.mubr.bf16.mxu0 0
      %884 = vmatmul.mubr.bf16.gmra.mrb[0].mxu0 %v736
      %v885 = vpop.f32.mrb[0].mxu0
      %v886 = vadd.f32 %v769, %v885
      %v887 = vpop.f32.mrb[0].mxu0
      %v888 = vpop.f32.mrb[0].mxu0
      %v889 = vadd.f32 %v769, %v888
      %v890 = vpop.f32.mrb[0].mxu0
      %891 = vmatprep.mubr.bf16.mxu0 0
      %892 = vmatmul.mubr.bf16.gmra.mrb[0].mxu0 %v737
      %v893 = vpop.f32.mrb[0].mxu0
      %v894 = vadd.f32 %v769, %v893
      %v895 = vpop.f32.mrb[0].mxu0
      %v896 = vpop.f32.mrb[0].mxu0
      %v897 = vadd.f32 %v769, %v896
      %v898 = vpop.f32.mrb[0].mxu0
      %899 = vmatprep.mubr.bf16.mxu0 0
      %900 = vmatmul.mubr.bf16.gmra.mrb[0].mxu0 %v738
      %v901 = vpop.f32.mrb[0].mxu0
      %v902 = vadd.f32 %v769, %v901
      %v903 = vpop.f32.mrb[0].mxu0
      %v904 = vpop.f32.mrb[0].mxu0
      %v905 = vadd.f32 %v769, %v904
      %v906 = vpop.f32.mrb[0].mxu0
      %907 = vmatprep.mubr.bf16.mxu0 0
      %908 = vmatmul.mubr.bf16.gmra.mrb[0].mxu0 %v739
      %v909 = vpop.f32.mrb[0].mxu0
      %v910 = vadd.f32 %v769, %v909
      %v911 = vpop.f32.mrb[0].mxu0
      %v912 = vpop.f32.mrb[0].mxu0
      %v913 = vadd.f32 %v769, %v912
      %v914 = vpop.f32.mrb[0].mxu0
      %915 = vmatprep.mubr.bf16.mxu0 0
      %916 = vmatmul.mubr.bf16.gmra.mrb[0].mxu0 %v740
      %v917 = vpop.f32.mrb[0].mxu0
      %v918 = vadd.f32 %v769, %v917
      %v919 = vpop.f32.mrb[0].mxu0
      %v920 = vpop.f32.mrb[0].mxu0
      %v921 = vadd.f32 %v769, %v920
      %v922 = vpop.f32.mrb[0].mxu0
      %923 = vmatprep.mubr.bf16.mxu0 0
      %924 = vmatmul.mubr.bf16.gmra.mrb[0].mxu0 %v741
      %v925 = vpop.f32.mrb[0].mxu0
      %v926 = vadd.f32 %v769, %v925
      %v927 = vpop.f32.mrb[0].mxu0
      %v928 = vpop.f32.mrb[0].mxu0
      %v929 = vadd.f32 %v769, %v928
      %v930 = vpop.f32.mrb[0].mxu0
      %931 = vmatprep.mubr.bf16.mxu0 0
      %932 = vmatmul.mubr.bf16.gmra.mrb[0].mxu0 %v742
      %v933 = vpop.f32.mrb[0].mxu0
      %v934 = vadd.f32 %v769, %v933
      %v935 = vpop.f32.mrb[0].mxu0
      %v936 = vpop.f32.mrb[0].mxu0
      %v937 = vadd.f32 %v769, %v936
      %v938 = vpop.f32.mrb[0].mxu0
      %939 = vmatprep.mubr.bf16.mxu0 0
      %940 = vmatmul.mubr.bf16.gmra.mrb[0].mxu0 %v743
      %v941 = vpop.f32.mrb[0].mxu0
      %v942 = vadd.f32 %v769, %v941
      %v943 = vpop.f32.mrb[0].mxu0
      %v944 = vpop.f32.mrb[0].mxu0
      %v945 = vadd.f32 %v769, %v944
      %v946 = vpop.f32.mrb[0].mxu0
      %947 = vmatprep.mubr.bf16.mxu0 0
      %948 = vmatmul.mubr.bf16.gmra.mrb[0].mxu0 %v744
      %v949 = vpop.f32.mrb[0].mxu0
      %v950 = vadd.f32 %v769, %v949
      %v951 = vpop.f32.mrb[0].mxu0
      %v952 = vpop.f32.mrb[0].mxu0
      %v953 = vadd.f32 %v769, %v952
      %v954 = vpop.f32.mrb[0].mxu0
      %955 = vmatprep.mubr.bf16.mxu0 0
      %956 = vmatmul.mubr.bf16.gmra.mrb[0].mxu0 %v745
      %v957 = vpop.f32.mrb[0].mxu0
      %v958 = vadd.f32 %v769, %v957
      %v959 = vpop.f32.mrb[0].mxu0
      %v960 = vpop.f32.mrb[0].mxu0
      %v961 = vadd.f32 %v769, %v960
      %v962 = vpop.f32.mrb[0].mxu0
      %963 = vmatprep.mubr.bf16.mxu0 0
      %964 = vmatmul.mubr.bf16.gmra.mrb[0].mxu0 %v746
      %v965 = vpop.f32.mrb[0].mxu0
      %v966 = vadd.f32 %v769, %v965
      %v967 = vpop.f32.mrb[0].mxu0
      %v968 = vpop.f32.mrb[0].mxu0
      %v969 = vadd.f32 %v769, %v968
      %v970 = vpop.f32.mrb[0].mxu0
      %971 = vmatprep.mubr.bf16.mxu0 0
      %972 = vmatmul.mubr.bf16.gmra.mrb[0].mxu0 %v747
      %v973 = vpop.f32.mrb[0].mxu0
      %v974 = vadd.f32 %v769, %v973
      %v975 = vpop.f32.mrb[0].mxu0
      %v976 = vpop.f32.mrb[0].mxu0
      %v977 = vadd.f32 %v769, %v976
      %v978 = vpop.f32.mrb[0].mxu0
      %979 = vdwg.mxu0
      %vm980 = vcmp.ge.f32.partialorder %v854, 0.0
      %vm981 = vcmp.ge.f32.partialorder %v857, 0.0
      %vm982 = vcmp.ge.f32.partialorder %v862, 0.0
      %vm983 = vcmp.ge.f32.partialorder %v865, 0.0
      %vm984 = vcmp.ge.f32.partialorder %v870, 0.0
      %vm985 = vcmp.ge.f32.partialorder %v873, 0.0
      %vm986 = vcmp.ge.f32.partialorder %v878, 0.0
      %vm987 = vcmp.ge.f32.partialorder %v881, 0.0
      %vm988 = vcmp.ge.f32.partialorder %v886, 0.0
      %vm989 = vcmp.ge.f32.partialorder %v889, 0.0
      %vm990 = vcmp.ge.f32.partialorder %v894, 0.0
      %vm991 = vcmp.ge.f32.partialorder %v897, 0.0
      %vm992 = vcmp.ge.f32.partialorder %v902, 0.0
      %vm993 = vcmp.ge.f32.partialorder %v905, 0.0
      %vm994 = vcmp.ge.f32.partialorder %v910, 0.0
      %vm995 = vcmp.ge.f32.partialorder %v913, 0.0
      %vm996 = vcmp.ge.f32.partialorder %v918, 0.0
      %vm997 = vcmp.ge.f32.partialorder %v921, 0.0
      %vm998 = vcmp.ge.f32.partialorder %v926, 0.0
      %vm999 = vcmp.ge.f32.partialorder %v929, 0.0
      %vm1000 = vcmp.ge.f32.partialorder %v934, 0.0
      %vm1001 = vcmp.ge.f32.partialorder %v937, 0.0
      %vm1002 = vcmp.ge.f32.partialorder %v942, 0.0
      %vm1003 = vcmp.ge.f32.partialorder %v945, 0.0
      %vm1004 = vcmp.ge.f32.partialorder %v950, 0.0
      %vm1005 = vcmp.ge.f32.partialorder %v953, 0.0
      %vm1006 = vcmp.ge.f32.partialorder %v958, 0.0
      %vm1007 = vcmp.ge.f32.partialorder %v961, 0.0
      %vm1008 = vcmp.ge.f32.partialorder %v966, 0.0
      %vm1009 = vcmp.ge.f32.partialorder %v969, 0.0
      %vm1010 = vcmp.ge.f32.partialorder %v974, 0.0
      %vm1011 = vcmp.ge.f32.partialorder %v977, 0.0
      %v1012 = vmul.f32 %v854, 0.01
      %v1013 = vmul.f32 %v857, 0.01
      %v1014 = vmul.f32 %v862, 0.01
      %v1015 = vmul.f32 %v865, 0.01
      %v1016 = vmul.f32 %v870, 0.01
      %v1017 = vmul.f32 %v873, 0.01
      %v1018 = vmul.f32 %v878, 0.01
      %v1019 = vmul.f32 %v881, 0.01
      %v1020 = vmul.f32 %v886, 0.01
      %v1021 = vmul.f32 %v889, 0.01
      %v1022 = vmul.f32 %v894, 0.01
      %v1023 = vmul.f32 %v897, 0.01
      %v1024 = vmul.f32 %v902, 0.01
      %v1025 = vmul.f32 %v905, 0.01
      %v1026 = vmul.f32 %v910, 0.01
      %v1027 = vmul.f32 %v913, 0.01
      %v1028 = vmul.f32 %v918, 0.01
      %v1029 = vmul.f32 %v921, 0.01
      %v1030 = vmul.f32 %v926, 0.01
      %v1031 = vmul.f32 %v929, 0.01
      %v1032 = vmul.f32 %v934, 0.01
      %v1033 = vmul.f32 %v937, 0.01
      %v1034 = vmul.f32 %v942, 0.01
      %v1035 = vmul.f32 %v945, 0.01
      %v1036 = vmul.f32 %v950, 0.01
      %v1037 = vmul.f32 %v953, 0.01
      %v1038 = vmul.f32 %v958, 0.01
      %v1039 = vmul.f32 %v961, 0.01
      %v1040 = vmul.f32 %v966, 0.01
      %v1041 = vmul.f32 %v969, 0.01
      %v1042 = vmul.f32 %v974, 0.01
      %v1043 = vmul.f32 %v977, 0.01
      %v1044 = vsel %vm980, %v854, %v1012
      %v1045 = vsel %vm981, %v857, %v1013
      %v1046 = vsel %vm982, %v862, %v1014
      %v1047 = vsel %vm983, %v865, %v1015
      %v1048 = vsel %vm984, %v870, %v1016
      %v1049 = vsel %vm985, %v873, %v1017
      %v1050 = vsel %vm986, %v878, %v1018
      %v1051 = vsel %vm987, %v881, %v1019
      %v1052 = vsel %vm988, %v886, %v1020
      %v1053 = vsel %vm989, %v889, %v1021
      %v1054 = vsel %vm990, %v894, %v1022
      %v1055 = vsel %vm991, %v897, %v1023
      %v1056 = vsel %vm992, %v902, %v1024
      %v1057 = vsel %vm993, %v905, %v1025
      %v1058 = vsel %vm994, %v910, %v1026
      %v1059 = vsel %vm995, %v913, %v1027
      %v1060 = vsel %vm996, %v918, %v1028
      %v1061 = vsel %vm997, %v921, %v1029
      %v1062 = vsel %vm998, %v926, %v1030
      %v1063 = vsel %vm999, %v929, %v1031
      %v1064 = vsel %vm1000, %v934, %v1032
      %v1065 = vsel %vm1001, %v937, %v1033
      %v1066 = vsel %vm1002, %v942, %v1034
      %v1067 = vsel %vm1003, %v945, %v1035
      %v1068 = vsel %vm1004, %v950, %v1036
      %v1069 = vsel %vm1005, %v953, %v1037
      %v1070 = vsel %vm1006, %v958, %v1038
      %v1071 = vsel %vm1007, %v961, %v1039
      %v1072 = vsel %vm1008, %v966, %v1040
      %v1073 = vsel %vm1009, %v969, %v1041
      %v1074 = vsel %vm1010, %v974, %v1042
      %v1075 = vsel %vm1011, %v977, %v1043
      %v1076 = vpack.c.bf16 %v1045, %v1044
      %v1077 = vpack.c.bf16 %v1047, %v1046
      %v1078 = vpack.c.bf16 %v1049, %v1048
      %v1079 = vpack.c.bf16 %v1051, %v1050
      %v1080 = vpack.c.bf16 %v1053, %v1052
      %v1081 = vpack.c.bf16 %v1055, %v1054
      %v1082 = vpack.c.bf16 %v1057, %v1056
      %v1083 = vpack.c.bf16 %v1059, %v1058
      %v1084 = vpack.c.bf16 %v1061, %v1060
      %v1085 = vpack.c.bf16 %v1063, %v1062
      %v1086 = vpack.c.bf16 %v1065, %v1064
      %v1087 = vpack.c.bf16 %v1067, %v1066
      %v1088 = vpack.c.bf16 %v1069, %v1068
      %v1089 = vpack.c.bf16 %v1071, %v1070
      %v1090 = vpack.c.bf16 %v1073, %v1072
      %v1091 = vpack.c.bf16 %v1075, %v1074
      %v1092 = vld [vmem:[%s5] sm:$0xf]
      %v1093 = vld [vmem:[%s5 + $0x4] sm:$0xf]
      %v1094 = vld [vmem:[%s5 + $0x8] sm:$0xf]
      %v1095 = vld [vmem:[%s5 + $0xc] sm:$0xf]
      %v1096 = vld [vmem:[%s5 + $0x10] sm:$0xf]
      %v1097 = vld [vmem:[%s5 + $0x14] sm:$0xf]
      %v1098 = vld [vmem:[%s5 + $0x18] sm:$0xf]
      %v1099 = vld [vmem:[%s5 + $0x1c] sm:$0xf]
      %v1100 = vld [vmem:[%s5 + $0x20] sm:$0xf]
      %v1101 = vld [vmem:[%s5 + $0x24] sm:$0xf]
      %v1102 = vld [vmem:[%s5 + $0x28] sm:$0xf]
      %v1103 = vld [vmem:[%s5 + $0x2c] sm:$0xf]
      %v1104 = vld [vmem:[%s5 + $0x30] sm:$0xf]
      %v1105 = vld [vmem:[%s5 + $0x34] sm:$0xf]
      %v1106 = vld [vmem:[%s5 + $0x38] sm:$0xf]
      %v1107 = vld [vmem:[%s5 + $0x3c] sm:$0xf]
      %v1124 = vunpack.c.l.b16 %v1092
      %v1125 = vunpack.c.l.b16 %v1093
      %v1126 = vunpack.c.l.b16 %v1094
      %v1127 = vunpack.c.l.b16 %v1095
      %v1128 = vunpack.c.l.b16 %v1096
      %v1129 = vunpack.c.l.b16 %v1097
      %v1130 = vunpack.c.l.b16 %v1098
      %v1131 = vunpack.c.l.b16 %v1099
      %v1132 = vunpack.c.l.b16 %v1100
      %v1133 = vunpack.c.l.b16 %v1101
      %v1134 = vunpack.c.l.b16 %v1102
      %v1135 = vunpack.c.l.b16 %v1103
      %v1136 = vunpack.c.l.b16 %v1104
      %v1137 = vunpack.c.l.b16 %v1105
      %v1138 = vunpack.c.l.b16 %v1106
      %v1139 = vunpack.c.l.b16 %v1107
      %v1140 = vpack.c.b16 %v1125, %v1124
      %v1141 = vpack.c.b16 %v1127, %v1126
      %v1142 = vpack.c.b16 %v1129, %v1128
      %v1143 = vpack.c.b16 %v1131, %v1130
      %v1144 = vpack.c.b16 %v1133, %v1132
      %v1145 = vpack.c.b16 %v1135, %v1134
      %v1146 = vpack.c.b16 %v1137, %v1136
      %v1147 = vpack.c.b16 %v1139, %v1138
      %1156 = vmatprep.subr.bf16.mxu0 0
      %1157 = vmatpush1.bf16.msra.mxu0 %v1140
      %1158 = vmatprep.subr.bf16.mxu0 0
      %1159 = vmatpush1.bf16.msra.mxu0 %v1141
      %1160 = vmatprep.subr.bf16.mxu0 0
      %1161 = vmatpush1.bf16.msra.mxu0 %v1142
      %1162 = vmatprep.subr.bf16.mxu0 0
      %1163 = vmatpush1.bf16.msra.mxu0 %v1143
      %1164 = vmatprep.subr.bf16.mxu0 0
      %1165 = vmatpush1.bf16.msra.mxu0 %v1144
      %1166 = vmatprep.subr.bf16.mxu0 0
      %1167 = vmatpush1.bf16.msra.mxu0 %v1145
      %1168 = vmatprep.subr.bf16.mxu0 0
      %1169 = vmatpush1.bf16.msra.mxu0 %v1146
      %1170 = vmatprep.subr.bf16.mxu0 0
      %1171 = vmatpush1.bf16.msra.mxu0 %v1147
      %1172 = vmatprep.subr.bf16.mxu0 0
      %1173 = vmatpush1.bf16.msra.mxu0 0
      %1174 = vmatprep.subr.bf16.mxu0 0
      %1175 = vmatpush1.bf16.msra.mxu0 0
      %1176 = vmatprep.subr.bf16.mxu0 0
      %1177 = vmatpush1.bf16.msra.mxu0 0
      %1178 = vmatprep.subr.bf16.mxu0 0
      %1179 = vmatpush1.bf16.msra.mxu0 0
      %1180 = vmatprep.subr.bf16.mxu0 0
      %1181 = vmatpush1.bf16.msra.mxu0 0
      %1182 = vmatprep.subr.bf16.mxu0 0
      %1183 = vmatpush1.bf16.msra.mxu0 0
      %1184 = vmatprep.subr.bf16.mxu0 0
      %1185 = vmatpush1.bf16.msra.mxu0 0
      %1186 = vmatprep.subr.bf16.mxu0 0
      %1187 = vmatpush1.bf16.msra.mxu0 0
      %1188 = vmatprep.mubr.bf16.mxu0 0
      %1189 = vmatmul.mubr.bf16.gmra.mrb[0].mxu0 %v1076
      %v1190 = vpop.f32.mrb[0].mxu0
      %v1191 = vadd.f32 0.0, %v1190
      %v1192 = vpop.f32.mrb[0].mxu0
      %v1193 = vpop.f32.mrb[0].mxu0
      %v1194 = vadd.f32 0.0, %v1193
      %v1195 = vpop.f32.mrb[0].mxu0
      %1196 = vmatprep.mubr.bf16.mxu0 0
      %1197 = vmatmul.mubr.bf16.gmra.mrb[0].mxu0 %v1077
      %v1198 = vpop.f32.mrb[0].mxu0
      %v1199 = vadd.f32 0.0, %v1198
      %v1200 = vpop.f32.mrb[0].mxu0
      %v1201 = vpop.f32.mrb[0].mxu0
      %v1202 = vadd.f32 0.0, %v1201
      %v1203 = vpop.f32.mrb[0].mxu0
      %1204 = vmatprep.mubr.bf16.mxu0 0
      %1205 = vmatmul.mubr.bf16.gmra.mrb[0].mxu0 %v1078
      %v1206 = vpop.f32.mrb[0].mxu0
      %v1207 = vadd.f32 0.0, %v1206
      %v1208 = vpop.f32.mrb[0].mxu0
      %v1209 = vpop.f32.mrb[0].mxu0
      %v1210 = vadd.f32 0.0, %v1209
      %v1211 = vpop.f32.mrb[0].mxu0
      %1212 = vmatprep.mubr.bf16.mxu0 0
      %1213 = vmatmul.mubr.bf16.gmra.mrb[0].mxu0 %v1079
      %v1214 = vpop.f32.mrb[0].mxu0
      %v1215 = vadd.f32 0.0, %v1214
      %v1216 = vpop.f32.mrb[0].mxu0
      %v1217 = vpop.f32.mrb[0].mxu0
      %v1218 = vadd.f32 0.0, %v1217
      %v1219 = vpop.f32.mrb[0].mxu0
      %1220 = vmatprep.mubr.bf16.mxu0 0
      %1221 = vmatmul.mubr.bf16.gmra.mrb[0].mxu0 %v1080
      %v1222 = vpop.f32.mrb[0].mxu0
      %v1223 = vadd.f32 0.0, %v1222
      %v1224 = vpop.f32.mrb[0].mxu0
      %v1225 = vpop.f32.mrb[0].mxu0
      %v1226 = vadd.f32 0.0, %v1225
      %v1227 = vpop.f32.mrb[0].mxu0
      %1228 = vmatprep.mubr.bf16.mxu0 0
      %1229 = vmatmul.mubr.bf16.gmra.mrb[0].mxu0 %v1081
      %v1230 = vpop.f32.mrb[0].mxu0
      %v1231 = vadd.f32 0.0, %v1230
      %v1232 = vpop.f32.mrb[0].mxu0
      %v1233 = vpop.f32.mrb[0].mxu0
      %v1234 = vadd.f32 0.0, %v1233
      %v1235 = vpop.f32.mrb[0].mxu0
      %1236 = vmatprep.mubr.bf16.mxu0 0
      %1237 = vmatmul.mubr.bf16.gmra.mrb[0].mxu0 %v1082
      %v1238 = vpop.f32.mrb[0].mxu0
      %v1239 = vadd.f32 0.0, %v1238
      %v1240 = vpop.f32.mrb[0].mxu0
      %v1241 = vpop.f32.mrb[0].mxu0
      %v1242 = vadd.f32 0.0, %v1241
      %v1243 = vpop.f32.mrb[0].mxu0
      %1244 = vmatprep.mubr.bf16.mxu0 0
      %1245 = vmatmul.mubr.bf16.gmra.mrb[0].mxu0 %v1083
      %v1246 = vpop.f32.mrb[0].mxu0
      %v1247 = vadd.f32 0.0, %v1246
      %v1248 = vpop.f32.mrb[0].mxu0
      %v1249 = vpop.f32.mrb[0].mxu0
      %v1250 = vadd.f32 0.0, %v1249
      %v1251 = vpop.f32.mrb[0].mxu0
      %1252 = vmatprep.mubr.bf16.mxu0 0
      %1253 = vmatmul.mubr.bf16.gmra.mrb[0].mxu0 %v1084
      %v1254 = vpop.f32.mrb[0].mxu0
      %v1255 = vadd.f32 0.0, %v1254
      %v1256 = vpop.f32.mrb[0].mxu0
      %v1257 = vpop.f32.mrb[0].mxu0
      %v1258 = vadd.f32 0.0, %v1257
      %v1259 = vpop.f32.mrb[0].mxu0
      %1260 = vmatprep.mubr.bf16.mxu0 0
      %1261 = vmatmul.mubr.bf16.gmra.mrb[0].mxu0 %v1085
      %v1262 = vpop.f32.mrb[0].mxu0
      %v1263 = vadd.f32 0.0, %v1262
      %v1264 = vpop.f32.mrb[0].mxu0
      %v1265 = vpop.f32.mrb[0].mxu0
      %v1266 = vadd.f32 0.0, %v1265
      %v1267 = vpop.f32.mrb[0].mxu0
      %1268 = vmatprep.mubr.bf16.mxu0 0
      %1269 = vmatmul.mubr.bf16.gmra.mrb[0].mxu0 %v1086
      %v1270 = vpop.f32.mrb[0].mxu0
      %v1271 = vadd.f32 0.0, %v1270
      %v1272 = vpop.f32.mrb[0].mxu0
      %v1273 = vpop.f32.mrb[0].mxu0
      %v1274 = vadd.f32 0.0, %v1273
      %v1275 = vpop.f32.mrb[0].mxu0
      %1276 = vmatprep.mubr.bf16.mxu0 0
      %1277 = vmatmul.mubr.bf16.gmra.mrb[0].mxu0 %v1087
      %v1278 = vpop.f32.mrb[0].mxu0
      %v1279 = vadd.f32 0.0, %v1278
      %v1280 = vpop.f32.mrb[0].mxu0
      %v1281 = vpop.f32.mrb[0].mxu0
      %v1282 = vadd.f32 0.0, %v1281
      %v1283 = vpop.f32.mrb[0].mxu0
      %1284 = vmatprep.mubr.bf16.mxu0 0
      %1285 = vmatmul.mubr.bf16.gmra.mrb[0].mxu0 %v1088
      %v1286 = vpop.f32.mrb[0].mxu0
      %v1287 = vadd.f32 0.0, %v1286
      %v1288 = vpop.f32.mrb[0].mxu0
      %v1289 = vpop.f32.mrb[0].mxu0
      %v1290 = vadd.f32 0.0, %v1289
      %v1291 = vpop.f32.mrb[0].mxu0
      %1292 = vmatprep.mubr.bf16.mxu0 0
      %1293 = vmatmul.mubr.bf16.gmra.mrb[0].mxu0 %v1089
      %v1294 = vpop.f32.mrb[0].mxu0
      %v1295 = vadd.f32 0.0, %v1294
      %v1296 = vpop.f32.mrb[0].mxu0
      %v1297 = vpop.f32.mrb[0].mxu0
      %v1298 = vadd.f32 0.0, %v1297
      %v1299 = vpop.f32.mrb[0].mxu0
      %1300 = vmatprep.mubr.bf16.mxu0 0
      %1301 = vmatmul.mubr.bf16.gmra.mrb[0].mxu0 %v1090
      %v1302 = vpop.f32.mrb[0].mxu0
      %v1303 = vadd.f32 0.0, %v1302
      %v1304 = vpop.f32.mrb[0].mxu0
      %v1305 = vpop.f32.mrb[0].mxu0
      %v1306 = vadd.f32 0.0, %v1305
      %v1307 = vpop.f32.mrb[0].mxu0
      %1308 = vmatprep.mubr.bf16.mxu0 0
      %1309 = vmatmul.mubr.bf16.gmra.mrb[0].mxu0 %v1091
      %v1310 = vpop.f32.mrb[0].mxu0
      %v1311 = vadd.f32 0.0, %v1310
      %v1312 = vpop.f32.mrb[0].mxu0
      %v1313 = vpop.f32.mrb[0].mxu0
      %v1314 = vadd.f32 0.0, %v1313
      %v1315 = vpop.f32.mrb[0].mxu0
      %1316 = vdwg.mxu0
      %v1317 = vadd.f32 %v439, %v1191
      %v1318 = vadd.f32 %v443, %v1194
      %v1319 = vadd.f32 %v449, %v1199
      %v1320 = vadd.f32 %v453, %v1202
      %v1321 = vadd.f32 %v459, %v1207
      %v1322 = vadd.f32 %v463, %v1210
      %v1323 = vadd.f32 %v469, %v1215
      %v1324 = vadd.f32 %v473, %v1218
      %v1325 = vadd.f32 %v479, %v1223
      %v1326 = vadd.f32 %v483, %v1226
      %v1327 = vadd.f32 %v489, %v1231
      %v1328 = vadd.f32 %v493, %v1234
      %v1329 = vadd.f32 %v499, %v1239
      %v1330 = vadd.f32 %v503, %v1242
      %v1331 = vadd.f32 %v509, %v1247
      %v1332 = vadd.f32 %v513, %v1250
      %v1333 = vadd.f32 %v519, %v1255
      %v1334 = vadd.f32 %v523, %v1258
      %v1335 = vadd.f32 %v529, %v1263
      %v1336 = vadd.f32 %v533, %v1266
      %v1337 = vadd.f32 %v539, %v1271
      %v1338 = vadd.f32 %v543, %v1274
      %v1339 = vadd.f32 %v549, %v1279
      %v1340 = vadd.f32 %v553, %v1282
      %v1341 = vadd.f32 %v559, %v1287
      %v1342 = vadd.f32 %v563, %v1290
      %v1343 = vadd.f32 %v569, %v1295
      %v1344 = vadd.f32 %v573, %v1298
      %v1345 = vadd.f32 %v579, %v1303
      %v1346 = vadd.f32 %v583, %v1306
      %v1347 = vadd.f32 %v589, %v1311
      %v1348 = vadd.f32 %v593, %v1314
      %v1349 = vld [vmem:[%s6] sm:$0x1]
      %v1351 = vlaneseq
      %v1352 = vshrl.u32 %v1351, 7
      %v1353 = vsub.s32 0, %v1352
      %v1354 = vrot.slane %v1349, %v1353
      %v1356 = vadd.f32 %v1317, %v1354
      %v1357 = vadd.f32 %v1318, %v1354
      %v1358 = vadd.f32 %v1319, %v1354
      %v1359 = vadd.f32 %v1320, %v1354
      %v1360 = vadd.f32 %v1321, %v1354
      %v1361 = vadd.f32 %v1322, %v1354
      %v1362 = vadd.f32 %v1323, %v1354
      %v1363 = vadd.f32 %v1324, %v1354
      %v1364 = vadd.f32 %v1325, %v1354
      %v1365 = vadd.f32 %v1326, %v1354
      %v1366 = vadd.f32 %v1327, %v1354
      %v1367 = vadd.f32 %v1328, %v1354
      %v1368 = vadd.f32 %v1329, %v1354
      %v1369 = vadd.f32 %v1330, %v1354
      %v1370 = vadd.f32 %v1331, %v1354
      %v1371 = vadd.f32 %v1332, %v1354
      %v1372 = vadd.f32 %v1333, %v1354
      %v1373 = vadd.f32 %v1334, %v1354
      %v1374 = vadd.f32 %v1335, %v1354
      %v1375 = vadd.f32 %v1336, %v1354
      %v1376 = vadd.f32 %v1337, %v1354
      %v1377 = vadd.f32 %v1338, %v1354
      %v1378 = vadd.f32 %v1339, %v1354
      %v1379 = vadd.f32 %v1340, %v1354
      %v1380 = vadd.f32 %v1341, %v1354
      %v1381 = vadd.f32 %v1342, %v1354
      %v1382 = vadd.f32 %v1343, %v1354
      %v1383 = vadd.f32 %v1344, %v1354
      %v1384 = vadd.f32 %v1345, %v1354
      %v1385 = vadd.f32 %v1346, %v1354
      %v1386 = vadd.f32 %v1347, %v1354
      %v1387 = vadd.f32 %v1348, %v1354
      %1388 = vst.msk [vmem:[%s280] sm:$0xff] %vm355, %v1356
      %1389 = vst.msk [vmem:[%s280 + $0x8] sm:$0xff] %vm355, %v1357
      %1390 = vst.msk [vmem:[%s280 + $0x10] sm:$0xff] %vm355, %v1358
      %1391 = vst.msk [vmem:[%s280 + $0x18] sm:$0xff] %vm355, %v1359
      %1392 = vst.msk [vmem:[%s280 + $0x20] sm:$0xff] %vm355, %v1360
      %1393 = vst.msk [vmem:[%s280 + $0x28] sm:$0xff] %vm355, %v1361
      %1394 = vst.msk [vmem:[%s280 + $0x30] sm:$0xff] %vm355, %v1362
      %1395 = vst.msk [vmem:[%s280 + $0x38] sm:$0xff] %vm355, %v1363
      %1396 = vst.msk [vmem:[%s280 + $0x40] sm:$0xff] %vm355, %v1364
      %1397 = vst.msk [vmem:[%s280 + $0x48] sm:$0xff] %vm355, %v1365
      %1398 = vst.msk [vmem:[%s280 + $0x50] sm:$0xff] %vm355, %v1366
      %1399 = vst.msk [vmem:[%s280 + $0x58] sm:$0xff] %vm355, %v1367
      %1400 = vst.msk [vmem:[%s280 + $0x60] sm:$0xff] %vm355, %v1368
      %1401 = vst.msk [vmem:[%s280 + $0x68] sm:$0xff] %vm355, %v1369
      %1402 = vst.msk [vmem:[%s280 + $0x70] sm:$0xff] %vm355, %v1370
      %1403 = vst.msk [vmem:[%s280 + $0x78] sm:$0xff] %vm355, %v1371
      %1404 = vst.msk [vmem:[%s280 + $0x80] sm:$0xff] %vm355, %v1372
      %1405 = vst.msk [vmem:[%s280 + $0x88] sm:$0xff] %vm355, %v1373
      %1406 = vst.msk [vmem:[%s280 + $0x90] sm:$0xff] %vm355, %v1374
      %1407 = vst.msk [vmem:[%s280 + $0x98] sm:$0xff] %vm355, %v1375
      %1408 = vst.msk [vmem:[%s280 + $0xa0] sm:$0xff] %vm355, %v1376
      %1409 = vst.msk [vmem:[%s280 + $0xa8] sm:$0xff] %vm355, %v1377
      %1410 = vst.msk [vmem:[%s280 + $0xb0] sm:$0xff] %vm355, %v1378
      %1411 = vst.msk [vmem:[%s280 + $0xb8] sm:$0xff] %vm355, %v1379
      %1412 = vst.msk [vmem:[%s280 + $0xc0] sm:$0xff] %vm355, %v1380
      %1413 = vst.msk [vmem:[%s280 + $0xc8] sm:$0xff] %vm355, %v1381
      %1414 = vst.msk [vmem:[%s280 + $0xd0] sm:$0xff] %vm355, %v1382
      %1415 = vst.msk [vmem:[%s280 + $0xd8] sm:$0xff] %vm355, %v1383
      %1416 = vst.msk [vmem:[%s280 + $0xe0] sm:$0xff] %vm355, %v1384
      %1417 = vst.msk [vmem:[%s280 + $0xe8] sm:$0xff] %vm355, %v1385
      %1418 = vst.msk [vmem:[%s280 + $0xf0] sm:$0xff] %vm355, %v1386
      %1419 = vst.msk [vmem:[%s280 + $0xf8] sm:$0xff] %vm355, %v1387
      %s1420 = smul.u32 32, %s18
      %p1421 = scmp.lt.s32.totalorder %s1420, 63
      %s1422 = scalar_select %p1421, %s1420, 63
      %s1423 = smul.addr %s1422, 8
      %s1424 = scalar_lea.vmem %s7, %s1423
      // Predicated region
      $region49: #{nam_forward.1} parent=47 // pred_check
        %p1425 = pneg %p188
      $region50: #{nam_forward.1} parent=47 // pred_check_branch
        %1427 = sbr.rel (%p1425) target = $region52
      $region51: #{nam_forward.1} parent=47 // pred_region
        %s1428 = smul.u32 32, %s18
      $region52: #{nam_forward.1} parent=47 // pred_fallthru
        _
    $region48: #{nam_forward.1} parent=5 // pred_fallthru
      _
    %p1429 = scmp.le.s32.totalorder 2, %s13
    // Predicated region
    $region53: #{nam_forward.1} parent=5 // pred_check
      %p1430 = pneg %p1429
    $region54: #{nam_forward.1} parent=5 // pred_check_branch
      %1432 = sbr.rel (%p1430) target = $region56
    $region55: #{nam_forward.1} parent=5 // pred_region
      %s1433 = ssub.s32 %s13, 2
      // Predicated region
      $region57: #{nam_forward.1} parent=55 // pred_check
        %p1434 = pneg %p194
      $region58: #{nam_forward.1} parent=55 // pred_check_branch
        %1436 = sbr.rel (%p1434) target = $region60
      $region59: #{nam_forward.1} parent=55 // pred_region
        %s1437 = smul.u32 32, %s19
        %p1438 = scmp.lt.s32.totalorder %s1437, 63
        %s1439 = scalar_select %p1438, %s1437, 63
        %s1440 = smul.addr %s1439, 8
        %s1441 = scalar_lea.vmem %s7, %s1440
      $region60: #{nam_forward.1} parent=55 // pred_fallthru
        _
    $region56: #{nam_forward.1} parent=5 // pred_fallthru
      _
  $region6: #{nam_forward.1} parent=0 // loop_footer
    %s17 = sadd.s32 1, %s13
  $region7: #{nam_forward.1} parent=0 // loop_footer_branch
    %12 = sbr.rel target = $region3
  $region8: #{nam_forward.1} parent=0 // loop_exit
    _

</llo_original>
